<compile_context>
chip_gen: v7x
topology: tpu7x:2x2x1
jax: 0.10.0
libtpu: 0.0.40
codegen_flags: <defaults>
</compile_context>

<pallas_src>
import functools

import jax
import jax.numpy as jnp
from jax.experimental import pallas as pl
from jax.experimental.pallas import tpu as pltpu


_VMEM_LIMIT_BYTES = 32 * 1024 * 1024  # explicit; safe on v5e/v6e/v7x


# ----------------------------------------------------------------------------
# Pallas kernel: conv-as-matmul + bias + ReLU + GAP + linear head, fully fused
# ----------------------------------------------------------------------------
def _encoder_kernel(x_ref, cw_ref, cb_ref, hw_ref, hb_ref, o_ref, acc_ref, *,
                    inv_spatial):
    """Grid: (encoder, spatial_tile).

    x_ref : (1, B, ts, Kp) bf16 im2col patches for the current spatial tile
    cw_ref: (1, Kp, C)     bf16 conv weights (resident across spatial steps)
    cb_ref: (1, 1, C)      f32 conv bias
    hw_ref: (1, C, Np)     f32 head weights (resident across spatial steps)
    hb_ref: (1, 1, Np)     f32 head bias
    o_ref : (1, B, Np)     f32 head output (written only in the finalize step)
    acc_ref:(B, C)         f32 running GAP sum over the spatial reduction axis
    """
    s = pl.program_id(1)

    @pl.when(s == 0)
    def _init():
        acc_ref[...] = jnp.zeros_like(acc_ref)

    w = cw_ref[0]        # (Kp, C)  bf16
    bias = cb_ref[0]     # (1, C)   f32
    batch = x_ref.shape[1]

    rows = []
    for b in range(batch):  # static unroll over the (tiny) batch dimension
        y = jnp.dot(x_ref[0, b], w, preferred_element_type=jnp.float32)  # (ts, C)
        y = jnp.maximum(y + bias, 0.0)                  # bias + ReLU per pixel
        rows.append(jnp.sum(y, axis=0, keepdims=True))  # (1, C) partial sum
    acc_ref[...] += jnp.concatenate(rows, axis=0)       # (B, C)

    @pl.when(s == pl.num_programs(1) - 1)
    def _finalize():
        pooled = acc_ref[...] * inv_spatial                             # (B, C)
        out = jnp.dot(pooled, hw_ref[0], preferred_element_type=jnp.float32)
        o_ref[0] = (out + hb_ref[0]).astype(o_ref.dtype)                # (B, Np)


# ----------------------------------------------------------------------------
# Pallas wrapper
# ----------------------------------------------------------------------------
def _pick_spatial_tile(s):
    """Largest 'nice' tile that divides the spatial extent (bounded by 2048)."""
    for cand in (2048, 1024, 512, 256, 128, 64, 32, 16, 8):
        if s % cand == 0:
            return cand
    # TODO(synk): ragged spatial sizes (H*W not a multiple of 8) fall back to
    #             a single full-S block.
    return s


def encode_fused(patches, conv_w, conv_b, head_w, head_b):
    """Fused conv3x3 (as matmul) + ReLU + GAP + linear head, one pallas_call.

    patches: (E, B, S, Kp) bf16, conv_w: (E, Kp, C) bf16, conv_b: (E, 1, C) f32
    head_w : (E, C, Np) f32,     head_b: (E, 1, Np) f32
    -> head outputs (E, B, Np) f32.
    """
    E, B, S, Kp = patches.shape
    C = conv_w.shape[-1]
    Np = head_w.shape[-1]
    ts = _pick_spatial_tile(S)
    kernel = functools.partial(_encoder_kernel, inv_spatial=1.0 / float(S))
    return pl.pallas_call(
        kernel,
        out_shape=jax.ShapeDtypeStruct((E, B, Np), jnp.float32),
        grid=(E, S // ts),
        in_specs=[
            pl.BlockSpec((1, B, ts, Kp), lambda e, s: (e, 0, s, 0)),
            pl.BlockSpec((1, Kp, C), lambda e, s: (e, 0, 0)),
            pl.BlockSpec((1, 1, C), lambda e, s: (e, 0, 0)),
            pl.BlockSpec((1, C, Np), lambda e, s: (e, 0, 0)),
            pl.BlockSpec((1, 1, Np), lambda e, s: (e, 0, 0)),
        ],
        out_specs=pl.BlockSpec((1, B, Np), lambda e, s: (e, 0, 0)),
        scratch_shapes=[pltpu.VMEM((B, C), jnp.float32)],
        compiler_params=pltpu.CompilerParams(
            dimension_semantics=("parallel", "arbitrary"),
            vmem_limit_bytes=_VMEM_LIMIT_BYTES,
        ),
    )(patches, conv_w, conv_b, head_w, head_b)


# ----------------------------------------------------------------------------
# Glue (pure-JAX layout prep / parameter setup)
# ----------------------------------------------------------------------------
def _round_up(x, m):
    return ((x + m - 1) // m) * m


def _im2col_3x3(x_nhwc, k_pad):
    """3x3, stride 1, pad 1 im2col: (B,H,W,C) -> (B, H*W, k_pad) bf16."""
    B, H, W, C = x_nhwc.shape
    xp = jnp.pad(x_nhwc, ((0, 0), (1, 1), (1, 1), (0, 0)))
    cols = [xp[:, di:di + H, dj:dj + W, :] for di in range(3) for dj in range(3)]
    patches = jnp.concatenate(cols, axis=-1).reshape(B, H * W, 9 * C)
    if k_pad > 9 * C:
        patches = jnp.pad(patches, ((0, 0), (0, 0), (0, k_pad - 9 * C)))
    return patches.astype(jnp.bfloat16)


def _run_encoders(images_list, params_list):
    """Run one or two synthetic encoders through the single fused Pallas call.

    All encoders are stacked along a leading 'encoder' axis and processed by
    one conv+GAP+head kernel.  Returns the un-padded head output of each.
    """
    n_outs = [p["head_w"].shape[1] for p in params_list]
    np_pad = max(_round_up(n, 128) for n in n_outs)   # lane-dense head output

    patches, conv_w, conv_b, head_w, head_b = [], [], [], [], []
    for img, p in zip(images_list, params_list):
        x = jnp.transpose(img, (0, 2, 3, 1)).astype(jnp.float32)   # NCHW -> NHWC
        _, _, _, cin = x.shape
        k_raw = 9 * cin
        k_pad = _round_up(k_raw, 32)                  # aligned contraction dim
        patches.append(_im2col_3x3(x, k_pad))

        cw = p["conv_w"].reshape(k_raw, -1)
        cw = jnp.pad(cw, ((0, k_pad - k_raw), (0, 0))).astype(jnp.bfloat16)
        conv_w.append(cw)
        conv_b.append(p["conv_b"].reshape(1, -1).astype(jnp.float32))

        hw = p["head_w"]
        n_out = hw.shape[1]
        head_w.append(jnp.pad(hw, ((0, 0), (0, np_pad - n_out))))
        head_b.append(jnp.pad(p["head_b"].reshape(1, -1),
                              ((0, 0), (0, np_pad - n_out))))

    patches = jnp.stack(patches)   # (E, B, S, Kp) bf16
    conv_w = jnp.stack(conv_w)     # (E, Kp, C)    bf16
    conv_b = jnp.stack(conv_b)     # (E, 1, C)     f32
    head_w = jnp.stack(head_w)     # (E, C, Np)    f32
    head_b = jnp.stack(head_b)     # (E, 1, Np)    f32

    heads = encode_fused(patches, conv_w, conv_b, head_w, head_b)  # (E, B, Np)
    return [heads[e, :, :n] for e, n in enumerate(n_outs)]


def init_params(key, cin=3, cout=128, emoca_params=236, mica_params=300):
    """cout=128 keeps the conv output lane-dense (full 128-lane vregs)."""
    ks = jax.random.split(key, 8)
    scale = 0.02

    def _enc(k0, k1, k2, k3, n_out):
        return {
            "conv_w": scale * jax.random.normal(k0, (3, 3, cin, cout), jnp.float32),
            "conv_b": scale * jax.random.normal(k1, (cout,), jnp.float32),
            "head_w": scale * jax.random.normal(k2, (cout, n_out), jnp.float32),
            "head_b": scale * jax.random.normal(k3, (n_out,), jnp.float32),
        }

    return {
        "emoca": _enc(ks[0], ks[1], ks[2], ks[3], emoca_params),
        "mica": _enc(ks[4], ks[5], ks[6], ks[7], mica_params),
    }


def feature_extractor_flame(params, emoca_images, mica_images=None):
    """Mirrors FeatureExtractorFLAME.forward."""
    if mica_images is not None and mica_images.shape == emoca_images.shape:
        # Both encoders share a single fused conv+GAP+head pallas_call
        # (length-2 "parallel" encoder grid axis -> both v7x TCs busy).
        emoca_out, mica_out = _run_encoders(
            [emoca_images, mica_images], [params["emoca"], params["mica"]]
        )
        shape = mica_out[:, :100]
    else:
        emoca_out = _run_encoders([emoca_images], [params["emoca"]])[0]
        shape = None
        if mica_images is not None:
            mica_out = _run_encoders([mica_images], [params["mica"]])[0]
            shape = mica_out[:, :100]

    # DECA/EMOCA parameter ordering: shape | tex | exp | pose | cam | light
    return {
        "shape": emoca_out[:, 0:100] if shape is None else shape,
        "expression": emoca_out[:, 150:200],
        "pose": emoca_out[:, 200:206],
    }


# ----------------------------------------------------------------------------
# Pure-JAX reference (f32) for numerical sanity checks
# ----------------------------------------------------------------------------
def _encode_ref(images_nchw, p):
    x = jnp.transpose(images_nchw, (0, 2, 3, 1)).astype(jnp.float32)
    B, H, W, C = x.shape
    xp = jnp.pad(x, ((0, 0), (1, 1), (1, 1), (0, 0)))
    cols = [xp[:, di:di + H, dj:dj + W, :] for di in range(3) for dj in range(3)]
    patches = jnp.concatenate(cols, axis=-1).reshape(B * H * W, 9 * C)
    feat = jnp.maximum(patches @ p["conv_w"].reshape(9 * C, -1) + p["conv_b"], 0.0)
    pooled = jnp.mean(feat.reshape(B, H * W, -1), axis=1)
    return pooled @ p["head_w"] + p["head_b"]


# ----------------------------------------------------------------------------
# Demo
# ----------------------------------------------------------------------------
if __name__ == "__main__":
    key = jax.random.PRNGKey(0)
    k_par, k_emoca, k_mica = jax.random.split(key, 3)

    params = init_params(k_par)

    # Small synthetic images, NCHW like the PyTorch module expects.
    emoca_images = jax.random.normal(k_emoca, (2, 3, 16, 16), jnp.float32)
    mica_images = jax.random.normal(k_mica, (2, 3, 16, 16), jnp.float32)

    fwd = jax.jit(feature_extractor_flame)

    results = fwd(params, emoca_images, mica_images)
    results = jax.tree_util.tree_map(jax.block_until_ready, results)

    assert results["shape"].shape == (2, 100)
    assert results["expression"].shape == (2, 50)
    assert results["pose"].shape == (2, 6)
    assert all(bool(jnp.all(jnp.isfinite(v))) for v in results.values())

    # Numerical check against the pure-JAX f32 reference (bf16 conv tolerance).
    emoca_ref = _encode_ref(emoca_images, params["emoca"])
    mica_ref = _encode_ref(mica_images, params["mica"])
    ref = {
        "shape": mica_ref[:, :100],
        "expression": emoca_ref[:, 150:200],
        "pose": emoca_ref[:, 200:206],
    }
    for name in ("shape", "expression", "pose"):
        assert jnp.allclose(results[name], ref[name], rtol=5e-2, atol=5e-3), name

    # Also exercise the mica_images=None branch (shape comes from EMOCA).
    results_no_mica = fwd(params, emoca_images, None)
    results_no_mica = jax.tree_util.tree_map(jax.block_until_ready, results_no_mica)
    assert results_no_mica["shape"].shape == (2, 100)
    assert jnp.allclose(results_no_mica["shape"], emoca_ref[:, :100],
                        rtol=5e-2, atol=5e-3)

    print("KERNEL_OK")
</pallas_src>

<mosaic_0001>
module attributes {stable_mosaic.version = 11 : i64} {
  func.func @_encoder_kernel(%arg0: i32, %arg1: i32, %arg2: memref<1x2x256x32xbf16, #tpu.memory_space<vmem>>, %arg3: memref<1x32x128xbf16, #tpu.memory_space<vmem>>, %arg4: memref<1x1x128xf32, #tpu.memory_space<vmem>>, %arg5: memref<1x128x384xf32, #tpu.memory_space<vmem>>, %arg6: memref<1x1x384xf32, #tpu.memory_space<vmem>>, %arg7: memref<1x2x384xf32, #tpu.memory_space<vmem>>, %arg8: memref<2x128xf32, #tpu.memory_space<vmem>>) attributes {dimension_semantics = [#tpu.dimension_semantics<parallel>, #tpu.dimension_semantics<arbitrary>], iteration_bounds = array<i64: 2, 1>, scalar_prefetch = 0 : i64, scratch_operands = 1 : i64, tpu.core_type = #tpu.core_type<tc>, window_params = [{transform_indices = @transform_0, window_bounds = array<i64: 1, 2, 256, 32>}, {transform_indices = @transform_1, window_bounds = array<i64: 1, 32, 128>}, {transform_indices = @transform_2, window_bounds = array<i64: 1, 1, 128>}, {transform_indices = @transform_3, window_bounds = array<i64: 1, 128, 384>}, {transform_indices = @transform_4, window_bounds = array<i64: 1, 1, 384>}, {transform_indices = @transform_5, window_bounds = array<i64: 1, 2, 384>}]} {
    %c0_i32 = arith.constant 0 : i32
    %0 = arith.cmpi eq, %arg1, %c0_i32 : i32
    %1 = arith.extui %0 : i1 to i32
    %c0_i32_0 = arith.constant 0 : i32
    %2 = arith.cmpi ne, %1, %c0_i32_0 : i32
    scf.if %2 {
      %cst_24 = arith.constant 0.000000e+00 : f32
      %32 = vector.broadcast %cst_24 : f32 to vector<2x128xf32>
      %c0_25 = arith.constant 0 : index
      %c0_26 = arith.constant 0 : index
      %33 = vector.load %arg8[%c0_25, %c0_26] : memref<2x128xf32, #tpu.memory_space<vmem>>, vector<2x128xf32>
      tpu.vector_store %arg8[%c0_25, %c0_26], %32 {strides = array<i32>} : memref<2x128xf32, #tpu.memory_space<vmem>>, vector<2x128xf32>,
    } else {
    }
    %c0 = arith.constant 0 : index
    %c0_1 = arith.constant 0 : index
    %c0_2 = arith.constant 0 : index
    %3 = vector.load %arg3[%c0, %c0_1, %c0_2] : memref<1x32x128xbf16, #tpu.memory_space<vmem>>, vector<1x32x128xbf16>
    %4 = vector.shape_cast %3 : vector<1x32x128xbf16> to vector<32x128xbf16>
    %c0_3 = arith.constant 0 : index
    %c0_4 = arith.constant 0 : index
    %c0_5 = arith.constant 0 : index
    %5 = vector.load %arg4[%c0_3, %c0_4, %c0_5] : memref<1x1x128xf32, #tpu.memory_space<vmem>>, vector<1x1x128xf32>
    %6 = vector.shape_cast %5 : vector<1x1x128xf32> to vector<1x128xf32>
    %c0_6 = arith.constant 0 : index
    %c0_7 = arith.constant 0 : index
    %c0_8 = arith.constant 0 : index
    %c0_9 = arith.constant 0 : index
    %7 = vector.load %arg2[%c0_6, %c0_7, %c0_8, %c0_9] : memref<1x2x256x32xbf16, #tpu.memory_space<vmem>>, vector<1x1x256x32xbf16>
    %8 = vector.shape_cast %7 : vector<1x1x256x32xbf16> to vector<256x32xbf16>
    %cst = arith.constant dense<0.000000e+00> : vector<256x128xf32>
    %9 = tpu.matmul %8, %4, %cst {dimension_numbers = #tpu.dot_dimension_numbers<[1], [0], [0], [1], [0, 0, 1, 1], [], []>} : vector<256x32xbf16>, vector<32x128xbf16>, vector<256x128xf32> -> vector<256x128xf32>
    %10 = vector.broadcast %6 : vector<1x128xf32> to vector<256x128xf32>
    %11 = arith.addf %9, %10 : vector<256x128xf32>
    %cst_10 = arith.constant 0.000000e+00 : f32
    %12 = vector.broadcast %cst_10 : f32 to vector<256x128xf32>
    %13 = arith.maximumf %11, %12 : vector<256x128xf32>
    %cst_11 = arith.constant dense<0.000000e+00> : vector<128xf32>
    %14 = vector.multi_reduction <add>, %13, %cst_11 [0] : vector<256x128xf32> to vector<128xf32>
    %15 = vector.shape_cast %14 : vector<128xf32> to vector<1x128xf32>
    %c0_12 = arith.constant 0 : index
    %c1 = arith.constant 1 : index
    %c0_13 = arith.constant 0 : index
    %c0_14 = arith.constant 0 : index
    %16 = vector.load %arg2[%c0_12, %c1, %c0_13, %c0_14] : memref<1x2x256x32xbf16, #tpu.memory_space<vmem>>, vector<1x1x256x32xbf16>
    %17 = vector.shape_cast %16 : vector<1x1x256x32xbf16> to vector<256x32xbf16>
    %cst_15 = arith.constant dense<0.000000e+00> : vector<256x128xf32>
    %18 = tpu.matmul %17, %4, %cst_15 {dimension_numbers = #tpu.dot_dimension_numbers<[1], [0], [0], [1], [0, 0, 1, 1], [], []>} : vector<256x32xbf16>, vector<32x128xbf16>, vector<256x128xf32> -> vector<256x128xf32>
    %19 = vector.broadcast %6 : vector<1x128xf32> to vector<256x128xf32>
    %20 = arith.addf %18, %19 : vector<256x128xf32>
    %cst_16 = arith.constant 0.000000e+00 : f32
    %21 = vector.broadcast %cst_16 : f32 to vector<256x128xf32>
    %22 = arith.maximumf %20, %21 : vector<256x128xf32>
    %cst_17 = arith.constant dense<0.000000e+00> : vector<128xf32>
    %23 = vector.multi_reduction <add>, %22, %cst_17 [0] : vector<256x128xf32> to vector<128xf32>
    %24 = vector.shape_cast %23 : vector<128xf32> to vector<1x128xf32>
    %c0_18 = arith.constant 0 : index
    %c0_19 = arith.constant 0 : index
    %25 = vector.load %arg8[%c0_18, %c0_19] : memref<2x128xf32, #tpu.memory_space<vmem>>, vector<2x128xf32>
    %26 = tpu.concatenate %15, %24 in 0 : vector<1x128xf32>, vector<1x128xf32> -> vector<2x128xf32>
    %27 = arith.addf %25, %26 : vector<2x128xf32>
    %c0_20 = arith.constant 0 : index
    %c0_21 = arith.constant 0 : index
    %28 = vector.load %arg8[%c0_20, %c0_21] : memref<2x128xf32, #tpu.memory_space<vmem>>, vector<2x128xf32>
    tpu.vector_store %arg8[%c0_20, %c0_21], %27 {strides = array<i32>} : memref<2x128xf32, #tpu.memory_space<vmem>>, vector<2x128xf32>,
    %c0_i32_22 = arith.constant 0 : i32
    %29 = arith.cmpi eq, %arg1, %c0_i32_22 : i32
    %30 = arith.extui %29 : i1 to i32
    %c0_i32_23 = arith.constant 0 : i32
    %31 = arith.cmpi ne, %30, %c0_i32_23 : i32
    scf.if %31 {
      %c0_24 = arith.constant 0 : index
      %c0_25 = arith.constant 0 : index
      %32 = vector.load %arg8[%c0_24, %c0_25] : memref<2x128xf32, #tpu.memory_space<vmem>>, vector<2x128xf32>
      %cst_26 = arith.constant 3.906250e-03 : f32
      %33 = vector.broadcast %cst_26 : f32 to vector<2x128xf32>
      %34 = arith.mulf %32, %33 : vector<2x128xf32>
      %c0_27 = arith.constant 0 : index
      %c0_28 = arith.constant 0 : index
      %c0_29 = arith.constant 0 : index
      %35 = vector.load %arg5[%c0_27, %c0_28, %c0_29] : memref<1x128x384xf32, #tpu.memory_space<vmem>>, vector<1x128x384xf32>
      %36 = vector.shape_cast %35 : vector<1x128x384xf32> to vector<128x384xf32>
      %cst_30 = arith.constant dense<0.000000e+00> : vector<2x384xf32>
      %37 = tpu.matmul %34, %36, %cst_30 {dimension_numbers = #tpu.dot_dimension_numbers<[1], [0], [0], [1], [0, 0, 1, 1], [], []>} : vector<2x128xf32>, vector<128x384xf32>, vector<2x384xf32> -> vector<2x384xf32>
      %c0_31 = arith.constant 0 : index
      %c0_32 = arith.constant 0 : index
      %c0_33 = arith.constant 0 : index
      %38 = vector.load %arg6[%c0_31, %c0_32, %c0_33] : memref<1x1x384xf32, #tpu.memory_space<vmem>>, vector<1x1x384xf32>
      %39 = vector.shape_cast %38 : vector<1x1x384xf32> to vector<1x384xf32>
      %40 = vector.broadcast %39 : vector<1x384xf32> to vector<2x384xf32>
      %41 = arith.addf %37, %40 : vector<2x384xf32>
      %c0_34 = arith.constant 0 : index
      %c0_35 = arith.constant 0 : index
      %c0_36 = arith.constant 0 : index
      %42 = vector.load %arg7[%c0_34, %c0_35, %c0_36] : memref<1x2x384xf32, #tpu.memory_space<vmem>>, vector<1x2x384xf32>
      %43 = vector.shape_cast %42 : vector<1x2x384xf32> to vector<2x384xf32>
      %44 = vector.shape_cast %41 : vector<2x384xf32> to vector<1x2x384xf32>
      tpu.vector_store %arg7[%c0_34, %c0_35, %c0_36], %44 {strides = array<i32>} : memref<1x2x384xf32, #tpu.memory_space<vmem>>, vector<1x2x384xf32>,
    } else {
    }
    return
  }
  func.func @transform_0(%arg0: i32, %arg1: i32) -> (i32, i32, i32, i32) {
    %c0_i32 = arith.constant 0 : i32
    %c0_i32_0 = arith.constant 0 : i32
    %c0_i32_1 = arith.constant 0 : i32
    return %arg0, %c0_i32, %arg1, %c0_i32_0 : i32, i32, i32, i32
  }
  func.func @transform_1(%arg0: i32, %arg1: i32) -> (i32, i32, i32) {
    %c0_i32 = arith.constant 0 : i32
    %c0_i32_0 = arith.constant 0 : i32
    %c0_i32_1 = arith.constant 0 : i32
    return %arg0, %c0_i32, %c0_i32_0 : i32, i32, i32
  }
  func.func @transform_2(%arg0: i32, %arg1: i32) -> (i32, i32, i32) {
    %c0_i32 = arith.constant 0 : i32
    %c0_i32_0 = arith.constant 0 : i32
    %c0_i32_1 = arith.constant 0 : i32
    return %arg0, %c0_i32, %c0_i32_0 : i32, i32, i32
  }
  func.func @transform_3(%arg0: i32, %arg1: i32) -> (i32, i32, i32) {
    %c0_i32 = arith.constant 0 : i32
    %c0_i32_0 = arith.constant 0 : i32
    %c0_i32_1 = arith.constant 0 : i32
    return %arg0, %c0_i32, %c0_i32_0 : i32, i32, i32
  }
  func.func @transform_4(%arg0: i32, %arg1: i32) -> (i32, i32, i32) {
    %c0_i32 = arith.constant 0 : i32
    %c0_i32_0 = arith.constant 0 : i32
    %c0_i32_1 = arith.constant 0 : i32
    return %arg0, %c0_i32, %c0_i32_0 : i32, i32, i32
  }
  func.func @transform_5(%arg0: i32, %arg1: i32) -> (i32, i32, i32) {
    %c0_i32 = arith.constant 0 : i32
    %c0_i32_0 = arith.constant 0 : i32
    %c0_i32_1 = arith.constant 0 : i32
    return %arg0, %c0_i32, %c0_i32_0 : i32, i32, i32
  }
}

</mosaic_0001>

<llo_original>
// kernel: feature_extractor_flame.1
$region0: #{feature_extractor_flame.1}
  #allocation0 [shape = 'u32[]', space=smem, size = 0x4, offset = 0x4, fixed_abs, tag = 'smem constant byte address 0x4 - core index']
  #allocation1 [shape = 'u32[144,128]{1,0:T(1,128)}', space=vmem, size = 0x12000, scoped, tag = 'internal scratch']
  #allocation2 [shape = 'f32[2,128]{1,0:T(2,128)}', space=vmem, size = 0x400, scoped, tag = 'scratch operand']
  %s0 = inlined_call_operand.vmem [shape: bf16[2,2,256,32], index: 0, kind: input, shape index: {}]
  %s1 = inlined_call_operand.vmem [shape: bf16[2,32,128], index: 1, kind: input, shape index: {}]
  %s2 = inlined_call_operand.vmem [shape: f32[2,1,128], index: 2, kind: input, shape index: {}]
  %s3 = inlined_call_operand.vmem [shape: f32[2,128,384], index: 3, kind: input, shape index: {}]
  %s4 = inlined_call_operand.vmem [shape: f32[2,1,384], index: 4, kind: input, shape index: {}]
  %s5 = inlined_call_operand.vmem [shape: f32[2,2,384], index: 5, kind: output, shape index: {}]
  %s6 = sld [smem:[#allocation0]]
  $region61: #{feature_extractor_flame.1} parent=0
    _
  %s8 = ssub.s32 1, %s6
  %s9 = scalar_select 0, %s8, %s6
  loop: start=0, step=1, limit=4
  $region2: #{feature_extractor_flame.1} parent=0 // loop_pre_header
    _
  $region3: #{feature_extractor_flame.1} parent=0 // loop_header
    %s11 = sphi 0, %s15
    %p12 = scmp.ge.s32.totalorder %s11, 4
    %s18 = sphi 0, %s30
    %s19 = sphi 0, %s26
    %s20 = sphi 0, %s18
    %s21 = sphi 0, %s19
    %s22 = sphi 0, %s20
    %s23 = sphi 0, %s21
    %s35 = sphi 0, %s37
    %s38 = sphi 0, %s35
    %s39 = sphi 0, %s38
    %s55 = sphi 0, %s39
    %s61 = sphi 0, %s63
    %s64 = sphi 0, %s61
    %s65 = sphi 0, %s64
    %s81 = sphi 0, %s65
    %s87 = sphi 0, %s89
    %s90 = sphi 0, %s87
    %s91 = sphi 0, %s90
    %s107 = sphi 0, %s91
    %s113 = sphi 0, %s115
    %s116 = sphi 0, %s113
    %s117 = sphi 0, %s116
    %s133 = sphi 0, %s117
    %s139 = sphi 0, %s141
    %s142 = sphi 0, %s139
    %s143 = sphi 0, %s142
    %s159 = sphi 0, %s143
    %s165 = sphi 0, %s167
    %s168 = sphi 0, %s165
    %s169 = sphi 0, %s168
    %s185 = sphi 0, %s169
  $region4: #{feature_extractor_flame.1} parent=0 // loop_header_branch
    %14 = sbr.rel (%p12) target = $region8
  $region5: #{feature_extractor_flame.1} parent=0 // loop_body
    %s16 = ssub.s32 %s11, 1
    %s17 = ssub.s32 %s11, 2
    %s24 = sadd.s32 1, %s19
    %p25 = scmp.ge.s32.totalorder %s24, 1
    %s26 = scalar_select %p25, 0, %s24
    %s27 = sadd.s32 1, %s18
    %s28 = scalar_select %p25, %s27, %s18
    %p29 = scmp.ge.s32.totalorder %s28, 2
    %s30 = scalar_select %p29, 0, %s28
    %s31 = ssub.s32 %s18, %s30
    %s32 = ssub.s32 %s19, %s26
    %s33 = sor.u32 %s31, %s32
    %p34 = scmp.eq.s32.totalorder %s33, 0
    %s36 = sadd.s32 %s35, 1
    %s37 = scalar_select %p34, %s35, %s36
    %p40 = pneg %p34
    %p41 = scmp.eq.s32.totalorder %s11, 1
    %p42 = por %p40, %p41
    %p43 = scmp.ne.s32.totalorder %s35, %s38
    %p44 = scmp.eq.s32.totalorder %s11, 0
    %p45 = por %p43, %p44
    %p46 = scmp.ne.s32.totalorder %s35, %s38
    %p47 = scmp.eq.s32.totalorder %s16, 1
    %p48 = por %p46, %p47
    %p49 = scmp.ne.s32.totalorder %s38, %s39
    %p50 = scmp.eq.s32.totalorder %s16, 0
    %p51 = por %p49, %p50
    %p52 = scmp.ne.s32.totalorder %s38, %s39
    %p53 = scmp.eq.s32.totalorder %s17, 1
    %p54 = por %p52, %p53
    %p56 = scmp.ne.s32.totalorder %s39, %s55
    %p57 = scmp.eq.s32.totalorder %s17, 0
    %p58 = por %p56, %p57
    %s59 = ssub.s32 %s18, %s30
    %p60 = scmp.eq.s32.totalorder %s59, 0
    %s62 = sadd.s32 %s61, 1
    %s63 = scalar_select %p60, %s61, %s62
    %p66 = pneg %p60
    %p67 = scmp.eq.s32.totalorder %s11, 1
    %p68 = por %p66, %p67
    %p69 = scmp.ne.s32.totalorder %s61, %s64
    %p70 = scmp.eq.s32.totalorder %s11, 0
    %p71 = por %p69, %p70
    %p72 = scmp.ne.s32.totalorder %s61, %s64
    %p73 = scmp.eq.s32.totalorder %s16, 1
    %p74 = por %p72, %p73
    %p75 = scmp.ne.s32.totalorder %s64, %s65
    %p76 = scmp.eq.s32.totalorder %s16, 0
    %p77 = por %p75, %p76
    %p78 = scmp.ne.s32.totalorder %s64, %s65
    %p79 = scmp.eq.s32.totalorder %s17, 1
    %p80 = por %p78, %p79
    %p82 = scmp.ne.s32.totalorder %s65, %s81
    %p83 = scmp.eq.s32.totalorder %s17, 0
    %p84 = por %p82, %p83
    %s85 = ssub.s32 %s18, %s30
    %p86 = scmp.eq.s32.totalorder %s85, 0
    %s88 = sadd.s32 %s87, 1
    %s89 = scalar_select %p86, %s87, %s88
    %p92 = pneg %p86
    %p93 = scmp.eq.s32.totalorder %s11, 1
    %p94 = por %p92, %p93
    %p95 = scmp.ne.s32.totalorder %s87, %s90
    %p96 = scmp.eq.s32.totalorder %s11, 0
    %p97 = por %p95, %p96
    %p98 = scmp.ne.s32.totalorder %s87, %s90
    %p99 = scmp.eq.s32.totalorder %s16, 1
    %p100 = por %p98, %p99
    %p101 = scmp.ne.s32.totalorder %s90, %s91
    %p102 = scmp.eq.s32.totalorder %s16, 0
    %p103 = por %p101, %p102
    %p104 = scmp.ne.s32.totalorder %s90, %s91
    %p105 = scmp.eq.s32.totalorder %s17, 1
    %p106 = por %p104, %p105
    %p108 = scmp.ne.s32.totalorder %s91, %s107
    %p109 = scmp.eq.s32.totalorder %s17, 0
    %p110 = por %p108, %p109
    %s111 = ssub.s32 %s18, %s30
    %p112 = scmp.eq.s32.totalorder %s111, 0
    %s114 = sadd.s32 %s113, 1
    %s115 = scalar_select %p112, %s113, %s114
    %p118 = pneg %p112
    %p119 = scmp.eq.s32.totalorder %s11, 1
    %p120 = por %p118, %p119
    %p121 = scmp.ne.s32.totalorder %s113, %s116
    %p122 = scmp.eq.s32.totalorder %s11, 0
    %p123 = por %p121, %p122
    %p124 = scmp.ne.s32.totalorder %s113, %s116
    %p125 = scmp.eq.s32.totalorder %s16, 1
    %p126 = por %p124, %p125
    %p127 = scmp.ne.s32.totalorder %s116, %s117
    %p128 = scmp.eq.s32.totalorder %s16, 0
    %p129 = por %p127, %p128
    %p130 = scmp.ne.s32.totalorder %s116, %s117
    %p131 = scmp.eq.s32.totalorder %s17, 1
    %p132 = por %p130, %p131
    %p134 = scmp.ne.s32.totalorder %s117, %s133
    %p135 = scmp.eq.s32.totalorder %s17, 0
    %p136 = por %p134, %p135
    %s137 = ssub.s32 %s18, %s30
    %p138 = scmp.eq.s32.totalorder %s137, 0
    %s140 = sadd.s32 %s139, 1
    %s141 = scalar_select %p138, %s139, %s140
    %p144 = pneg %p138
    %p145 = scmp.eq.s32.totalorder %s11, 1
    %p146 = por %p144, %p145
    %p147 = scmp.ne.s32.totalorder %s139, %s142
    %p148 = scmp.eq.s32.totalorder %s11, 0
    %p149 = por %p147, %p148
    %p150 = scmp.ne.s32.totalorder %s139, %s142
    %p151 = scmp.eq.s32.totalorder %s16, 1
    %p152 = por %p150, %p151
    %p153 = scmp.ne.s32.totalorder %s142, %s143
    %p154 = scmp.eq.s32.totalorder %s16, 0
    %p155 = por %p153, %p154
    %p156 = scmp.ne.s32.totalorder %s142, %s143
    %p157 = scmp.eq.s32.totalorder %s17, 1
    %p158 = por %p156, %p157
    %p160 = scmp.ne.s32.totalorder %s143, %s159
    %p161 = scmp.eq.s32.totalorder %s17, 0
    %p162 = por %p160, %p161
    %s163 = ssub.s32 %s18, %s30
    %p164 = scmp.eq.s32.totalorder %s163, 0
    %s166 = sadd.s32 %s165, 1
    %s167 = scalar_select %p164, %s165, %s166
    %p170 = pneg %p164
    %p171 = scmp.eq.s32.totalorder %s11, 1
    %p172 = por %p170, %p171
    %p173 = scmp.ne.s32.totalorder %s165, %s168
    %p174 = scmp.eq.s32.totalorder %s11, 0
    %p175 = por %p173, %p174
    %p176 = scmp.ne.s32.totalorder %s165, %s168
    %p177 = scmp.eq.s32.totalorder %s16, 1
    %p178 = por %p176, %p177
    %p179 = scmp.ne.s32.totalorder %s168, %s169
    %p180 = scmp.eq.s32.totalorder %s16, 0
    %p181 = por %p179, %p180
    %p182 = scmp.ne.s32.totalorder %s168, %s169
    %p183 = scmp.eq.s32.totalorder %s17, 1
    %p184 = por %p182, %p183
    %p186 = scmp.ne.s32.totalorder %s169, %s185
    %p187 = scmp.eq.s32.totalorder %s17, 0
    %p188 = por %p186, %p187
    %p189 = scmp.le.s32.totalorder 1, %s11
    %p190 = scmp.lt.s32.totalorder %s11, 3
    %p191 = pnand %p189, %p190
    %p192 = pneg %p191
    // Predicated region
    $region9: #{feature_extractor_flame.1} parent=5 // pred_check
      _
    $region10: #{feature_extractor_flame.1} parent=5 // pred_check_branch
      %194 = sbr.rel (%p191) target = $region12
    $region11: #{feature_extractor_flame.1} parent=5 // pred_region
      %s195 = ssub.s32 %s11, 1
    $region12: #{feature_extractor_flame.1} parent=5 // pred_fallthru
      _
    %p196 = scmp.lt.s32.totalorder %s11, 2
    // Predicated region
    $region13: #{feature_extractor_flame.1} parent=5 // pred_check
      %p197 = pneg %p196
    $region14: #{feature_extractor_flame.1} parent=5 // pred_check_branch
      %199 = sbr.rel (%p197) target = $region16
    $region15: #{feature_extractor_flame.1} parent=5 // pred_region
      // Predicated region
      $region17: #{feature_extractor_flame.1} parent=15 // pred_check
        %p200 = pneg %p45
      $region18: #{feature_extractor_flame.1} parent=15 // pred_check_branch
        %202 = sbr.rel (%p200) target = $region20
      $region19: #{feature_extractor_flame.1} parent=15 // pred_region
        %s203 = smul.u32 32, %s19
        %p204 = scmp.lt.s32.totalorder %s18, 1
        %s205 = scalar_select %p204, %s18, 1
        %p206 = scmp.lt.s32.totalorder %s203, 31
        %s207 = scalar_select %p206, %s203, 31
        %s208 = smul.addr %s205, 64
        %s209 = sadd.s32 %s207, %s208
        %s210 = smul.addr %s209, 4
        %s211 = scalar_lea.vmem %s0, %s210
        %s212 = smul.u32 32, %s19
      $region20: #{feature_extractor_flame.1} parent=15 // pred_fallthru
        _
      // Predicated region
      $region21: #{feature_extractor_flame.1} parent=15 // pred_check
        %p213 = pneg %p71
      $region22: #{feature_extractor_flame.1} parent=15 // pred_check_branch
        %215 = sbr.rel (%p213) target = $region24
      $region23: #{feature_extractor_flame.1} parent=15 // pred_region
        %p216 = scmp.lt.s32.totalorder %s18, 1
        %s217 = scalar_select %p216, %s18, 1
        %s218 = smul.addr %s217, 4
        %s219 = smul.addr %s218, 4
        %s220 = scalar_lea.vmem %s1, %s219
      $region24: #{feature_extractor_flame.1} parent=15 // pred_fallthru
        _
      // Predicated region
      $region25: #{feature_extractor_flame.1} parent=15 // pred_check
        %p221 = pneg %p97
      $region26: #{feature_extractor_flame.1} parent=15 // pred_check_branch
        %223 = sbr.rel (%p221) target = $region28
      $region27: #{feature_extractor_flame.1} parent=15 // pred_region
        %p224 = scmp.lt.s32.totalorder %s18, 1
        %s225 = scalar_select %p224, %s18, 1
        %s226 = scalar_lea.vmem %s2, %s225
      $region28: #{feature_extractor_flame.1} parent=15 // pred_fallthru
        _
      // Predicated region
      $region29: #{feature_extractor_flame.1} parent=15 // pred_check
        %p227 = pneg %p123
      $region30: #{feature_extractor_flame.1} parent=15 // pred_check_branch
        %229 = sbr.rel (%p227) target = $region32
      $region31: #{feature_extractor_flame.1} parent=15 // pred_region
        %p230 = scmp.lt.s32.totalorder %s18, 1
        %s231 = scalar_select %p230, %s18, 1
        %s232 = smul.addr %s231, 48
        %s233 = smul.addr %s232, 8
        %s234 = scalar_lea.vmem %s3, %s233
      $region32: #{feature_extractor_flame.1} parent=15 // pred_fallthru
        _
      // Predicated region
      $region33: #{feature_extractor_flame.1} parent=15 // pred_check
        %p235 = pneg %p149
      $region34: #{feature_extractor_flame.1} parent=15 // pred_check_branch
        %237 = sbr.rel (%p235) target = $region36
      $region35: #{feature_extractor_flame.1} parent=15 // pred_region
        %p238 = scmp.lt.s32.totalorder %s18, 1
        %s239 = scalar_select %p238, %s18, 1
        %s240 = smul.addr %s239, 3
        %s241 = scalar_lea.vmem %s4, %s240
      $region36: #{feature_extractor_flame.1} parent=15 // pred_fallthru
        _
    $region16: #{feature_extractor_flame.1} parent=5 // pred_fallthru
      _
    %p242 = scmp.le.s32.totalorder 1, %s11
    %p243 = scmp.lt.s32.totalorder %s11, 3
    %p244 = pnand %p242, %p243
    %p245 = pneg %p244
    // Predicated region
    $region37: #{feature_extractor_flame.1} parent=5 // pred_check
      _
    $region38: #{feature_extractor_flame.1} parent=5 // pred_check_branch
      %247 = sbr.rel (%p244) target = $region40
    $region39: #{feature_extractor_flame.1} parent=5 // pred_region
      %s248 = ssub.s32 %s11, 1
      %s249 = smul.u32 32, %s21
      %p250 = scmp.lt.s32.totalorder %s20, 1
      %s251 = scalar_select %p250, %s20, 1
      %p252 = scmp.lt.s32.totalorder %s249, 31
      %s253 = scalar_select %p252, %s249, 31
      %s254 = smul.addr %s251, 64
      %s255 = sadd.s32 %s253, %s254
      %s256 = smul.addr %s255, 4
      %s257 = scalar_lea.vmem %s0, %s256
      %p258 = pneg %p51
      %p259 = pneg %p48
      %p260 = scmp.lt.s32.totalorder %s20, 1
      %s261 = scalar_select %p260, %s20, 1
      %s262 = smul.addr %s261, 4
      %s263 = smul.addr %s262, 4
      %s264 = scalar_lea.vmem %s1, %s263
      %p265 = pneg %p77
      %p266 = pneg %p74
      %p267 = scmp.lt.s32.totalorder %s20, 1
      %s268 = scalar_select %p267, %s20, 1
      %s269 = scalar_lea.vmem %s2, %s268
      %p270 = pneg %p103
      %p271 = pneg %p100
      %p272 = scmp.lt.s32.totalorder %s20, 1
      %s273 = scalar_select %p272, %s20, 1
      %s274 = smul.addr %s273, 48
      %s275 = smul.addr %s274, 8
      %s276 = scalar_lea.vmem %s3, %s275
      %p277 = pneg %p129
      %p278 = pneg %p126
      %p279 = scmp.lt.s32.totalorder %s20, 1
      %s280 = scalar_select %p279, %s20, 1
      %s281 = smul.addr %s280, 3
      %s282 = scalar_lea.vmem %s4, %s281
      %p283 = pneg %p155
      %p284 = pneg %p152
      %p285 = pneg %p181
      %p286 = pneg %p178
      %p287 = scmp.lt.s32.totalorder %s20, 1
      %s288 = scalar_select %p287, %s20, 1
      %s289 = smul.addr %s288, 3
      %s290 = smul.addr %s289, 2
      %s291 = scalar_lea.vmem %s5, %s290
      %s292 = smul.u32 32, %s21
      %p293 = scmp.lt.s32.totalorder %s20, 1
      %s294 = scalar_select %p293, %s20, 1
      %p295 = scmp.lt.s32.totalorder %s292, 31
      %s296 = scalar_select %p295, %s292, 31
      %s297 = smul.addr %s294, 64
      %s298 = sadd.s32 %s296, %s297
      %s299 = smul.addr %s298, 4
      %s300 = scalar_lea.vmem %s0, %s299
      %s301 = smul.u32 32, %s21
      %p302 = scmp.lt.s32.totalorder %s20, 1
      %s303 = scalar_select %p302, %s20, 1
      %s304 = smul.addr %s303, 4
      %s305 = smul.addr %s304, 4
      %s306 = scalar_lea.vmem %s1, %s305
      %p307 = scmp.lt.s32.totalorder %s20, 1
      %s308 = scalar_select %p307, %s20, 1
      %s309 = scalar_lea.vmem %s2, %s308
      %p310 = scmp.lt.s32.totalorder %s20, 1
      %s311 = scalar_select %p310, %s20, 1
      %s312 = smul.addr %s311, 48
      %s313 = smul.addr %s312, 8
      %s314 = scalar_lea.vmem %s3, %s313
      %p315 = scmp.lt.s32.totalorder %s20, 1
      %s316 = scalar_select %p315, %s20, 1
      %s317 = smul.addr %s316, 3
      %s318 = scalar_lea.vmem %s4, %s317
      %p319 = scmp.lt.s32.totalorder %s20, 1
      %s320 = scalar_select %p319, %s20, 1
      %s321 = smul.addr %s320, 3
      %s322 = smul.addr %s321, 2
      %s323 = scalar_lea.vmem %s5, %s322
      %p325 = scmp.eq.s32.totalorder %s21, 0
      // Predicated region
      $region41: #{feature_extractor_flame.1} parent=39 // pred_check
        %p326 = pneg %p325
      $region42: #{feature_extractor_flame.1} parent=39 // pred_check_branch
        %328 = sbr.rel (%p326) target = $region44
      $region43: #{feature_extractor_flame.1} parent=39 // pred_region
        %329 = vst [vmem:[#allocation2] sm:$0x3] 0.0
      $region44: #{feature_extractor_flame.1} parent=39 // pred_fallthru
        _
      %v330 = vld [vmem:[%s306] sm:$0xf]
      %v331 = vld [vmem:[%s306 + $0x4] sm:$0xf]
      %v332 = vld [vmem:[%s306 + $0x8] sm:$0xf]
      %v333 = vld [vmem:[%s306 + $0xc] sm:$0xf]
      %v334 = vld [vmem:[%s309] sm:$0x1]
      %v335 = vld [vmem:[%s300] sm:$0xf]
      %v336 = vld [vmem:[%s300 + $0x4] sm:$0xf]
      %v337 = vld [vmem:[%s300 + $0x8] sm:$0xf]
      %v338 = vld [vmem:[%s300 + $0xc] sm:$0xf]
      %v339 = vld [vmem:[%s300 + $0x10] sm:$0xf]
      %v340 = vld [vmem:[%s300 + $0x14] sm:$0xf]
      %v341 = vld [vmem:[%s300 + $0x18] sm:$0xf]
      %v342 = vld [vmem:[%s300 + $0x1c] sm:$0xf]
      %v343 = vld [vmem:[%s300 + $0x20] sm:$0xf]
      %v344 = vld [vmem:[%s300 + $0x24] sm:$0xf]
      %v345 = vld [vmem:[%s300 + $0x28] sm:$0xf]
      %v346 = vld [vmem:[%s300 + $0x2c] sm:$0xf]
      %v347 = vld [vmem:[%s300 + $0x30] sm:$0xf]
      %v348 = vld [vmem:[%s300 + $0x34] sm:$0xf]
      %v349 = vld [vmem:[%s300 + $0x38] sm:$0xf]
      %v350 = vld [vmem:[%s300 + $0x3c] sm:$0xf]
      %v351 = vld [vmem:[%s300 + $0x40] sm:$0xf]
      %v352 = vld [vmem:[%s300 + $0x44] sm:$0xf]
      %v353 = vld [vmem:[%s300 + $0x48] sm:$0xf]
      %v354 = vld [vmem:[%s300 + $0x4c] sm:$0xf]
      %v355 = vld [vmem:[%s300 + $0x50] sm:$0xf]
      %v356 = vld [vmem:[%s300 + $0x54] sm:$0xf]
      %v357 = vld [vmem:[%s300 + $0x58] sm:$0xf]
      %v358 = vld [vmem:[%s300 + $0x5c] sm:$0xf]
      %v359 = vld [vmem:[%s300 + $0x60] sm:$0xf]
      %v360 = vld [vmem:[%s300 + $0x64] sm:$0xf]
      %v361 = vld [vmem:[%s300 + $0x68] sm:$0xf]
      %v362 = vld [vmem:[%s300 + $0x6c] sm:$0xf]
      %v363 = vld [vmem:[%s300 + $0x70] sm:$0xf]
      %v364 = vld [vmem:[%s300 + $0x74] sm:$0xf]
      %v365 = vld [vmem:[%s300 + $0x78] sm:$0xf]
      %v366 = vld [vmem:[%s300 + $0x7c] sm:$0xf]
      %v368 = vlaneseq
      %v369 = vshrl.u32 %v368, 7
      %v370 = vsub.s32 0, %v369
      %v371 = vrot.slane %v334, %v370
      %v405 = vunpack.c.l.b16 %v335
      %v406 = vunpack.c.l.b16 %v336
      %v407 = vunpack.c.l.b16 %v337
      %v408 = vunpack.c.l.b16 %v338
      %v409 = vunpack.c.l.b16 %v339
      %v410 = vunpack.c.l.b16 %v340
      %v411 = vunpack.c.l.b16 %v341
      %v412 = vunpack.c.l.b16 %v342
      %v413 = vunpack.c.l.b16 %v343
      %v414 = vunpack.c.l.b16 %v344
      %v415 = vunpack.c.l.b16 %v345
      %v416 = vunpack.c.l.b16 %v346
      %v417 = vunpack.c.l.b16 %v347
      %v418 = vunpack.c.l.b16 %v348
      %v419 = vunpack.c.l.b16 %v349
      %v420 = vunpack.c.l.b16 %v350
      %v421 = vunpack.c.l.b16 %v351
      %v422 = vunpack.c.l.b16 %v352
      %v423 = vunpack.c.l.b16 %v353
      %v424 = vunpack.c.l.b16 %v354
      %v425 = vunpack.c.l.b16 %v355
      %v426 = vunpack.c.l.b16 %v356
      %v427 = vunpack.c.l.b16 %v357
      %v428 = vunpack.c.l.b16 %v358
      %v429 = vunpack.c.l.b16 %v359
      %v430 = vunpack.c.l.b16 %v360
      %v431 = vunpack.c.l.b16 %v361
      %v432 = vunpack.c.l.b16 %v362
      %v433 = vunpack.c.l.b16 %v363
      %v434 = vunpack.c.l.b16 %v364
      %v435 = vunpack.c.l.b16 %v365
      %v436 = vunpack.c.l.b16 %v366
      %v437 = vpack.c.b16 %v406, %v405
      %v438 = vpack.c.b16 %v408, %v407
      %v439 = vpack.c.b16 %v410, %v409
      %v440 = vpack.c.b16 %v412, %v411
      %v441 = vpack.c.b16 %v414, %v413
      %v442 = vpack.c.b16 %v416, %v415
      %v443 = vpack.c.b16 %v418, %v417
      %v444 = vpack.c.b16 %v420, %v419
      %v445 = vpack.c.b16 %v422, %v421
      %v446 = vpack.c.b16 %v424, %v423
      %v447 = vpack.c.b16 %v426, %v425
      %v448 = vpack.c.b16 %v428, %v427
      %v449 = vpack.c.b16 %v430, %v429
      %v450 = vpack.c.b16 %v432, %v431
      %v451 = vpack.c.b16 %v434, %v433
      %v452 = vpack.c.b16 %v436, %v435
      %v457 = vunpack.c.l.b16 %v330
      %v458 = vunpack.c.l.b16 %v331
      %v459 = vunpack.c.l.b16 %v332
      %v460 = vunpack.c.l.b16 %v333
      %v461 = vpack.c.b16 %v458, %v457
      %v462 = vpack.c.b16 %v460, %v459
      %vm465 = vcmask 261120
      %v467 = vsel %vm465, %v437, 0
      %v470 = vsel %vm465, %v438, 0
      %v473 = vsel %vm465, %v439, 0
      %v476 = vsel %vm465, %v440, 0
      %v479 = vsel %vm465, %v441, 0
      %v482 = vsel %vm465, %v442, 0
      %v485 = vsel %vm465, %v443, 0
      %v488 = vsel %vm465, %v444, 0
      %v491 = vsel %vm465, %v445, 0
      %v494 = vsel %vm465, %v446, 0
      %v497 = vsel %vm465, %v447, 0
      %v500 = vsel %vm465, %v448, 0
      %v503 = vsel %vm465, %v449, 0
      %v506 = vsel %vm465, %v450, 0
      %v509 = vsel %vm465, %v451, 0
      %v512 = vsel %vm465, %v452, 0
      %514 = vmatprep.subr.bf16.mxu0 0
      %515 = vmatpush1.bf16.msra.mxu0 %v461
      %516 = vmatprep.subr.bf16.mxu0 0
      %517 = vmatpush1.bf16.msra.mxu0 %v462
      %518 = vmatprep.subr.bf16.mxu0 0
      %519 = vmatpush1.bf16.msra.mxu0 0
      %520 = vmatprep.subr.bf16.mxu0 0
      %521 = vmatpush1.bf16.msra.mxu0 0
      %522 = vmatprep.subr.bf16.mxu0 0
      %523 = vmatpush1.bf16.msra.mxu0 0
      %524 = vmatprep.subr.bf16.mxu0 0
      %525 = vmatpush1.bf16.msra.mxu0 0
      %526 = vmatprep.subr.bf16.mxu0 0
      %527 = vmatpush1.bf16.msra.mxu0 0
      %528 = vmatprep.subr.bf16.mxu0 0
      %529 = vmatpush1.bf16.msra.mxu0 0
      %530 = vmatprep.subr.bf16.mxu0 0
      %531 = vmatpush1.bf16.msra.mxu0 0
      %532 = vmatprep.subr.bf16.mxu0 0
      %533 = vmatpush1.bf16.msra.mxu0 0
      %534 = vmatprep.subr.bf16.mxu0 0
      %535 = vmatpush1.bf16.msra.mxu0 0
      %536 = vmatprep.subr.bf16.mxu0 0
      %537 = vmatpush1.bf16.msra.mxu0 0
      %538 = vmatprep.subr.bf16.mxu0 0
      %539 = vmatpush1.bf16.msra.mxu0 0
      %540 = vmatprep.subr.bf16.mxu0 0
      %541 = vmatpush1.bf16.msra.mxu0 0
      %542 = vmatprep.subr.bf16.mxu0 0
      %543 = vmatpush1.bf16.msra.mxu0 0
      %544 = vmatprep.subr.bf16.mxu0 0
      %545 = vmatpush1.bf16.msra.mxu0 0
      %546 = vmatprep.mubr.bf16.mxu0 0
      %547 = vmatmul.mubr.bf16.gmra.mrb[0].mxu0 %v467
      %v548 = vpop.f32.mrb[0].mxu0
      %v549 = vadd.f32 %v371, %v548
      %v550 = vpop.f32.mrb[0].mxu0
      %v551 = vpop.f32.mrb[0].mxu0
      %v552 = vadd.f32 %v371, %v551
      %v553 = vpop.f32.mrb[0].mxu0
      %554 = vmatprep.mubr.bf16.mxu0 0
      %555 = vmatmul.mubr.bf16.gmra.mrb[0].mxu0 %v470
      %v556 = vpop.f32.mrb[0].mxu0
      %v557 = vadd.f32 %v371, %v556
      %v558 = vpop.f32.mrb[0].mxu0
      %v559 = vpop.f32.mrb[0].mxu0
      %v560 = vadd.f32 %v371, %v559
      %v561 = vpop.f32.mrb[0].mxu0
      %562 = vmatprep.mubr.bf16.mxu0 0
      %563 = vmatmul.mubr.bf16.gmra.mrb[0].mxu0 %v473
      %v564 = vpop.f32.mrb[0].mxu0
      %v565 = vadd.f32 %v371, %v564
      %v566 = vpop.f32.mrb[0].mxu0
      %v567 = vpop.f32.mrb[0].mxu0
      %v568 = vadd.f32 %v371, %v567
      %v569 = vpop.f32.mrb[0].mxu0
      %570 = vmatprep.mubr.bf16.mxu0 0
      %571 = vmatmul.mubr.bf16.gmra.mrb[0].mxu0 %v476
      %v572 = vpop.f32.mrb[0].mxu0
      %v573 = vadd.f32 %v371, %v572
      %v574 = vpop.f32.mrb[0].mxu0
      %v575 = vpop.f32.mrb[0].mxu0
      %v576 = vadd.f32 %v371, %v575
      %v577 = vpop.f32.mrb[0].mxu0
      %578 = vmatprep.mubr.bf16.mxu0 0
      %579 = vmatmul.mubr.bf16.gmra.mrb[0].mxu0 %v479
      %v580 = vpop.f32.mrb[0].mxu0
      %v581 = vadd.f32 %v371, %v580
      %v582 = vpop.f32.mrb[0].mxu0
      %v583 = vpop.f32.mrb[0].mxu0
      %v584 = vadd.f32 %v371, %v583
      %v585 = vpop.f32.mrb[0].mxu0
      %586 = vmatprep.mubr.bf16.mxu0 0
      %587 = vmatmul.mubr.bf16.gmra.mrb[0].mxu0 %v482
      %v588 = vpop.f32.mrb[0].mxu0
      %v589 = vadd.f32 %v371, %v588
      %v590 = vpop.f32.mrb[0].mxu0
      %v591 = vpop.f32.mrb[0].mxu0
      %v592 = vadd.f32 %v371, %v591
      %v593 = vpop.f32.mrb[0].mxu0
      %594 = vmatprep.mubr.bf16.mxu0 0
      %595 = vmatmul.mubr.bf16.gmra.mrb[0].mxu0 %v485
      %v596 = vpop.f32.mrb[0].mxu0
      %v597 = vadd.f32 %v371, %v596
      %v598 = vpop.f32.mrb[0].mxu0
      %v599 = vpop.f32.mrb[0].mxu0
      %v600 = vadd.f32 %v371, %v599
      %v601 = vpop.f32.mrb[0].mxu0
      %602 = vmatprep.mubr.bf16.mxu0 0
      %603 = vmatmul.mubr.bf16.gmra.mrb[0].mxu0 %v488
      %v604 = vpop.f32.mrb[0].mxu0
      %v605 = vadd.f32 %v371, %v604
      %v606 = vpop.f32.mrb[0].mxu0
      %v607 = vpop.f32.mrb[0].mxu0
      %v608 = vadd.f32 %v371, %v607
      %v609 = vpop.f32.mrb[0].mxu0
      %610 = vmatprep.mubr.bf16.mxu0 0
      %611 = vmatmul.mubr.bf16.gmra.mrb[0].mxu0 %v491
      %v612 = vpop.f32.mrb[0].mxu0
      %v613 = vadd.f32 %v371, %v612
      %v614 = vpop.f32.mrb[0].mxu0
      %v615 = vpop.f32.mrb[0].mxu0
      %v616 = vadd.f32 %v371, %v615
      %v617 = vpop.f32.mrb[0].mxu0
      %618 = vmatprep.mubr.bf16.mxu0 0
      %619 = vmatmul.mubr.bf16.gmra.mrb[0].mxu0 %v494
      %v620 = vpop.f32.mrb[0].mxu0
      %v621 = vadd.f32 %v371, %v620
      %v622 = vpop.f32.mrb[0].mxu0
      %v623 = vpop.f32.mrb[0].mxu0
      %v624 = vadd.f32 %v371, %v623
      %v625 = vpop.f32.mrb[0].mxu0
      %626 = vmatprep.mubr.bf16.mxu0 0
      %627 = vmatmul.mubr.bf16.gmra.mrb[0].mxu0 %v497
      %v628 = vpop.f32.mrb[0].mxu0
      %v629 = vadd.f32 %v371, %v628
      %v630 = vpop.f32.mrb[0].mxu0
      %v631 = vpop.f32.mrb[0].mxu0
      %v632 = vadd.f32 %v371, %v631
      %v633 = vpop.f32.mrb[0].mxu0
      %634 = vmatprep.mubr.bf16.mxu0 0
      %635 = vmatmul.mubr.bf16.gmra.mrb[0].mxu0 %v500
      %v636 = vpop.f32.mrb[0].mxu0
      %v637 = vadd.f32 %v371, %v636
      %v638 = vpop.f32.mrb[0].mxu0
      %v639 = vpop.f32.mrb[0].mxu0
      %v640 = vadd.f32 %v371, %v639
      %v641 = vpop.f32.mrb[0].mxu0
      %642 = vmatprep.mubr.bf16.mxu0 0
      %643 = vmatmul.mubr.bf16.gmra.mrb[0].mxu0 %v503
      %v644 = vpop.f32.mrb[0].mxu0
      %v645 = vadd.f32 %v371, %v644
      %v646 = vpop.f32.mrb[0].mxu0
      %v647 = vpop.f32.mrb[0].mxu0
      %v648 = vadd.f32 %v371, %v647
      %v649 = vpop.f32.mrb[0].mxu0
      %650 = vmatprep.mubr.bf16.mxu0 0
      %651 = vmatmul.mubr.bf16.gmra.mrb[0].mxu0 %v506
      %v652 = vpop.f32.mrb[0].mxu0
      %v653 = vadd.f32 %v371, %v652
      %v654 = vpop.f32.mrb[0].mxu0
      %v655 = vpop.f32.mrb[0].mxu0
      %v656 = vadd.f32 %v371, %v655
      %v657 = vpop.f32.mrb[0].mxu0
      %658 = vmatprep.mubr.bf16.mxu0 0
      %659 = vmatmul.mubr.bf16.gmra.mrb[0].mxu0 %v509
      %v660 = vpop.f32.mrb[0].mxu0
      %v661 = vadd.f32 %v371, %v660
      %v662 = vpop.f32.mrb[0].mxu0
      %v663 = vpop.f32.mrb[0].mxu0
      %v664 = vadd.f32 %v371, %v663
      %v665 = vpop.f32.mrb[0].mxu0
      %666 = vmatprep.mubr.bf16.mxu0 0
      %667 = vmatmul.mubr.bf16.gmra.mrb[0].mxu0 %v512
      %v668 = vpop.f32.mrb[0].mxu0
      %v669 = vadd.f32 %v371, %v668
      %v670 = vpop.f32.mrb[0].mxu0
      %v671 = vpop.f32.mrb[0].mxu0
      %v672 = vadd.f32 %v371, %v671
      %v673 = vpop.f32.mrb[0].mxu0
      %674 = vdwg.mxu0
      %v675 = vmax.f32 %v549, 0.0
      %v676 = vmax.f32 %v552, 0.0
      %v677 = vmax.f32 %v557, 0.0
      %v678 = vmax.f32 %v560, 0.0
      %v679 = vmax.f32 %v565, 0.0
      %v680 = vmax.f32 %v568, 0.0
      %v681 = vmax.f32 %v573, 0.0
      %v682 = vmax.f32 %v576, 0.0
      %v683 = vmax.f32 %v581, 0.0
      %v684 = vmax.f32 %v584, 0.0
      %v685 = vmax.f32 %v589, 0.0
      %v686 = vmax.f32 %v592, 0.0
      %v687 = vmax.f32 %v597, 0.0
      %v688 = vmax.f32 %v600, 0.0
      %v689 = vmax.f32 %v605, 0.0
      %v690 = vmax.f32 %v608, 0.0
      %v691 = vmax.f32 %v613, 0.0
      %v692 = vmax.f32 %v616, 0.0
      %v693 = vmax.f32 %v621, 0.0
      %v694 = vmax.f32 %v624, 0.0
      %v695 = vmax.f32 %v629, 0.0
      %v696 = vmax.f32 %v632, 0.0
      %v697 = vmax.f32 %v637, 0.0
      %v698 = vmax.f32 %v640, 0.0
      %v699 = vmax.f32 %v645, 0.0
      %v700 = vmax.f32 %v648, 0.0
      %v701 = vmax.f32 %v653, 0.0
      %v702 = vmax.f32 %v656, 0.0
      %v703 = vmax.f32 %v661, 0.0
      %v704 = vmax.f32 %v664, 0.0
      %v705 = vmax.f32 %v669, 0.0
      %v706 = vmax.f32 %v672, 0.0
      %v707 = vadd.f32 %v675, %v676
      %v708 = vadd.f32 %v707, %v677
      %v709 = vadd.f32 %v708, %v678
      %v710 = vadd.f32 %v709, %v679
      %v711 = vadd.f32 %v710, %v680
      %v712 = vadd.f32 %v711, %v681
      %v713 = vadd.f32 %v712, %v682
      %v714 = vadd.f32 %v713, %v683
      %v715 = vadd.f32 %v714, %v684
      %v716 = vadd.f32 %v715, %v685
      %v717 = vadd.f32 %v716, %v686
      %v718 = vadd.f32 %v717, %v687
      %v719 = vadd.f32 %v718, %v688
      %v720 = vadd.f32 %v719, %v689
      %v721 = vadd.f32 %v720, %v690
      %v722 = vadd.f32 %v721, %v691
      %v723 = vadd.f32 %v722, %v692
      %v724 = vadd.f32 %v723, %v693
      %v725 = vadd.f32 %v724, %v694
      %v726 = vadd.f32 %v725, %v695
      %v727 = vadd.f32 %v726, %v696
      %v728 = vadd.f32 %v727, %v697
      %v729 = vadd.f32 %v728, %v698
      %v730 = vadd.f32 %v729, %v699
      %v731 = vadd.f32 %v730, %v700
      %v732 = vadd.f32 %v731, %v701
      %v733 = vadd.f32 %v732, %v702
      %v734 = vadd.f32 %v733, %v703
      %v735 = vadd.f32 %v734, %v704
      %v736 = vadd.f32 %v735, %v705
      %v737 = vadd.f32 %v736, %v706
      %v738 = vrot.slane %v737, 4
      %v739 = vadd.f32 %v737, %v738
      %v740 = vrot.slane %v739, 2
      %v741 = vadd.f32 %v739, %v740
      %v742 = vrot.slane %v741, 1
      %v743 = vadd.f32 %v741, %v742
      %s744 = scalar_lea.vmem %s300, 128
      %v745 = vld [vmem:[%s744] sm:$0xf]
      %v746 = vld [vmem:[%s744 + $0x4] sm:$0xf]
      %v747 = vld [vmem:[%s744 + $0x8] sm:$0xf]
      %v748 = vld [vmem:[%s744 + $0xc] sm:$0xf]
      %v749 = vld [vmem:[%s744 + $0x10] sm:$0xf]
      %v750 = vld [vmem:[%s744 + $0x14] sm:$0xf]
      %v751 = vld [vmem:[%s744 + $0x18] sm:$0xf]
      %v752 = vld [vmem:[%s744 + $0x1c] sm:$0xf]
      %v753 = vld [vmem:[%s744 + $0x20] sm:$0xf]
      %v754 = vld [vmem:[%s744 + $0x24] sm:$0xf]
      %v755 = vld [vmem:[%s744 + $0x28] sm:$0xf]
      %v756 = vld [vmem:[%s744 + $0x2c] sm:$0xf]
      %v757 = vld [vmem:[%s744 + $0x30] sm:$0xf]
      %v758 = vld [vmem:[%s744 + $0x34] sm:$0xf]
      %v759 = vld [vmem:[%s744 + $0x38] sm:$0xf]
      %v760 = vld [vmem:[%s744 + $0x3c] sm:$0xf]
      %v761 = vld [vmem:[%s744 + $0x40] sm:$0xf]
      %v762 = vld [vmem:[%s744 + $0x44] sm:$0xf]
      %v763 = vld [vmem:[%s744 + $0x48] sm:$0xf]
      %v764 = vld [vmem:[%s744 + $0x4c] sm:$0xf]
      %v765 = vld [vmem:[%s744 + $0x50] sm:$0xf]
      %v766 = vld [vmem:[%s744 + $0x54] sm:$0xf]
      %v767 = vld [vmem:[%s744 + $0x58] sm:$0xf]
      %v768 = vld [vmem:[%s744 + $0x5c] sm:$0xf]
      %v769 = vld [vmem:[%s744 + $0x60] sm:$0xf]
      %v770 = vld [vmem:[%s744 + $0x64] sm:$0xf]
      %v771 = vld [vmem:[%s744 + $0x68] sm:$0xf]
      %v772 = vld [vmem:[%s744 + $0x6c] sm:$0xf]
      %v773 = vld [vmem:[%s744 + $0x70] sm:$0xf]
      %v774 = vld [vmem:[%s744 + $0x74] sm:$0xf]
      %v775 = vld [vmem:[%s744 + $0x78] sm:$0xf]
      %v776 = vld [vmem:[%s744 + $0x7c] sm:$0xf]
      %v809 = vunpack.c.l.b16 %v745
      %v810 = vunpack.c.l.b16 %v746
      %v811 = vunpack.c.l.b16 %v747
      %v812 = vunpack.c.l.b16 %v748
      %v813 = vunpack.c.l.b16 %v749
      %v814 = vunpack.c.l.b16 %v750
      %v815 = vunpack.c.l.b16 %v751
      %v816 = vunpack.c.l.b16 %v752
      %v817 = vunpack.c.l.b16 %v753
      %v818 = vunpack.c.l.b16 %v754
      %v819 = vunpack.c.l.b16 %v755
      %v820 = vunpack.c.l.b16 %v756
      %v821 = vunpack.c.l.b16 %v757
      %v822 = vunpack.c.l.b16 %v758
      %v823 = vunpack.c.l.b16 %v759
      %v824 = vunpack.c.l.b16 %v760
      %v825 = vunpack.c.l.b16 %v761
      %v826 = vunpack.c.l.b16 %v762
      %v827 = vunpack.c.l.b16 %v763
      %v828 = vunpack.c.l.b16 %v764
      %v829 = vunpack.c.l.b16 %v765
      %v830 = vunpack.c.l.b16 %v766
      %v831 = vunpack.c.l.b16 %v767
      %v832 = vunpack.c.l.b16 %v768
      %v833 = vunpack.c.l.b16 %v769
      %v834 = vunpack.c.l.b16 %v770
      %v835 = vunpack.c.l.b16 %v771
      %v836 = vunpack.c.l.b16 %v772
      %v837 = vunpack.c.l.b16 %v773
      %v838 = vunpack.c.l.b16 %v774
      %v839 = vunpack.c.l.b16 %v775
      %v840 = vunpack.c.l.b16 %v776
      %v841 = vpack.c.b16 %v810, %v809
      %v842 = vpack.c.b16 %v812, %v811
      %v843 = vpack.c.b16 %v814, %v813
      %v844 = vpack.c.b16 %v816, %v815
      %v845 = vpack.c.b16 %v818, %v817
      %v846 = vpack.c.b16 %v820, %v819
      %v847 = vpack.c.b16 %v822, %v821
      %v848 = vpack.c.b16 %v824, %v823
      %v849 = vpack.c.b16 %v826, %v825
      %v850 = vpack.c.b16 %v828, %v827
      %v851 = vpack.c.b16 %v830, %v829
      %v852 = vpack.c.b16 %v832, %v831
      %v853 = vpack.c.b16 %v834, %v833
      %v854 = vpack.c.b16 %v836, %v835
      %v855 = vpack.c.b16 %v838, %v837
      %v856 = vpack.c.b16 %v840, %v839
      %v858 = vsel %vm465, %v841, 0
      %v861 = vsel %vm465, %v842, 0
      %v864 = vsel %vm465, %v843, 0
      %v867 = vsel %vm465, %v844, 0
      %v870 = vsel %vm465, %v845, 0
      %v873 = vsel %vm465, %v846, 0
      %v876 = vsel %vm465, %v847, 0
      %v879 = vsel %vm465, %v848, 0
      %v882 = vsel %vm465, %v849, 0
      %v885 = vsel %vm465, %v850, 0
      %v888 = vsel %vm465, %v851, 0
      %v891 = vsel %vm465, %v852, 0
      %v894 = vsel %vm465, %v853, 0
      %v897 = vsel %vm465, %v854, 0
      %v900 = vsel %vm465, %v855, 0
      %v903 = vsel %vm465, %v856, 0
      %905 = vmatprep.subr.bf16.mxu0 0
      %906 = vmatpush1.bf16.msra.mxu0 %v461
      %907 = vmatprep.subr.bf16.mxu0 0
      %908 = vmatpush1.bf16.msra.mxu0 %v462
      %909 = vmatprep.subr.bf16.mxu0 0
      %910 = vmatpush1.bf16.msra.mxu0 0
      %911 = vmatprep.subr.bf16.mxu0 0
      %912 = vmatpush1.bf16.msra.mxu0 0
      %913 = vmatprep.subr.bf16.mxu0 0
      %914 = vmatpush1.bf16.msra.mxu0 0
      %915 = vmatprep.subr.bf16.mxu0 0
      %916 = vmatpush1.bf16.msra.mxu0 0
      %917 = vmatprep.subr.bf16.mxu0 0
      %918 = vmatpush1.bf16.msra.mxu0 0
      %919 = vmatprep.subr.bf16.mxu0 0
      %920 = vmatpush1.bf16.msra.mxu0 0
      %921 = vmatprep.subr.bf16.mxu0 0
      %922 = vmatpush1.bf16.msra.mxu0 0
      %923 = vmatprep.subr.bf16.mxu0 0
      %924 = vmatpush1.bf16.msra.mxu0 0
      %925 = vmatprep.subr.bf16.mxu0 0
      %926 = vmatpush1.bf16.msra.mxu0 0
      %927 = vmatprep.subr.bf16.mxu0 0
      %928 = vmatpush1.bf16.msra.mxu0 0
      %929 = vmatprep.subr.bf16.mxu0 0
      %930 = vmatpush1.bf16.msra.mxu0 0
      %931 = vmatprep.subr.bf16.mxu0 0
      %932 = vmatpush1.bf16.msra.mxu0 0
      %933 = vmatprep.subr.bf16.mxu0 0
      %934 = vmatpush1.bf16.msra.mxu0 0
      %935 = vmatprep.subr.bf16.mxu0 0
      %936 = vmatpush1.bf16.msra.mxu0 0
      %937 = vmatprep.mubr.bf16.mxu0 0
      %938 = vmatmul.mubr.bf16.gmra.mrb[0].mxu0 %v858
      %v939 = vpop.f32.mrb[0].mxu0
      %v940 = vadd.f32 %v371, %v939
      %v941 = vpop.f32.mrb[0].mxu0
      %v942 = vpop.f32.mrb[0].mxu0
      %v943 = vadd.f32 %v371, %v942
      %v944 = vpop.f32.mrb[0].mxu0
      %945 = vmatprep.mubr.bf16.mxu0 0
      %946 = vmatmul.mubr.bf16.gmra.mrb[0].mxu0 %v861
      %v947 = vpop.f32.mrb[0].mxu0
      %v948 = vadd.f32 %v371, %v947
      %v949 = vpop.f32.mrb[0].mxu0
      %v950 = vpop.f32.mrb[0].mxu0
      %v951 = vadd.f32 %v371, %v950
      %v952 = vpop.f32.mrb[0].mxu0
      %953 = vmatprep.mubr.bf16.mxu0 0
      %954 = vmatmul.mubr.bf16.gmra.mrb[0].mxu0 %v864
      %v955 = vpop.f32.mrb[0].mxu0
      %v956 = vadd.f32 %v371, %v955
      %v957 = vpop.f32.mrb[0].mxu0
      %v958 = vpop.f32.mrb[0].mxu0
      %v959 = vadd.f32 %v371, %v958
      %v960 = vpop.f32.mrb[0].mxu0
      %961 = vmatprep.mubr.bf16.mxu0 0
      %962 = vmatmul.mubr.bf16.gmra.mrb[0].mxu0 %v867
      %v963 = vpop.f32.mrb[0].mxu0
      %v964 = vadd.f32 %v371, %v963
      %v965 = vpop.f32.mrb[0].mxu0
      %v966 = vpop.f32.mrb[0].mxu0
      %v967 = vadd.f32 %v371, %v966
      %v968 = vpop.f32.mrb[0].mxu0
      %969 = vmatprep.mubr.bf16.mxu0 0
      %970 = vmatmul.mubr.bf16.gmra.mrb[0].mxu0 %v870
      %v971 = vpop.f32.mrb[0].mxu0
      %v972 = vadd.f32 %v371, %v971
      %v973 = vpop.f32.mrb[0].mxu0
      %v974 = vpop.f32.mrb[0].mxu0
      %v975 = vadd.f32 %v371, %v974
      %v976 = vpop.f32.mrb[0].mxu0
      %977 = vmatprep.mubr.bf16.mxu0 0
      %978 = vmatmul.mubr.bf16.gmra.mrb[0].mxu0 %v873
      %v979 = vpop.f32.mrb[0].mxu0
      %v980 = vadd.f32 %v371, %v979
      %v981 = vpop.f32.mrb[0].mxu0
      %v982 = vpop.f32.mrb[0].mxu0
      %v983 = vadd.f32 %v371, %v982
      %v984 = vpop.f32.mrb[0].mxu0
      %985 = vmatprep.mubr.bf16.mxu0 0
      %986 = vmatmul.mubr.bf16.gmra.mrb[0].mxu0 %v876
      %v987 = vpop.f32.mrb[0].mxu0
      %v988 = vadd.f32 %v371, %v987
      %v989 = vpop.f32.mrb[0].mxu0
      %v990 = vpop.f32.mrb[0].mxu0
      %v991 = vadd.f32 %v371, %v990
      %v992 = vpop.f32.mrb[0].mxu0
      %993 = vmatprep.mubr.bf16.mxu0 0
      %994 = vmatmul.mubr.bf16.gmra.mrb[0].mxu0 %v879
      %v995 = vpop.f32.mrb[0].mxu0
      %v996 = vadd.f32 %v371, %v995
      %v997 = vpop.f32.mrb[0].mxu0
      %v998 = vpop.f32.mrb[0].mxu0
      %v999 = vadd.f32 %v371, %v998
      %v1000 = vpop.f32.mrb[0].mxu0
      %1001 = vmatprep.mubr.bf16.mxu0 0
      %1002 = vmatmul.mubr.bf16.gmra.mrb[0].mxu0 %v882
      %v1003 = vpop.f32.mrb[0].mxu0
      %v1004 = vadd.f32 %v371, %v1003
      %v1005 = vpop.f32.mrb[0].mxu0
      %v1006 = vpop.f32.mrb[0].mxu0
      %v1007 = vadd.f32 %v371, %v1006
      %v1008 = vpop.f32.mrb[0].mxu0
      %1009 = vmatprep.mubr.bf16.mxu0 0
      %1010 = vmatmul.mubr.bf16.gmra.mrb[0].mxu0 %v885
      %v1011 = vpop.f32.mrb[0].mxu0
      %v1012 = vadd.f32 %v371, %v1011
      %v1013 = vpop.f32.mrb[0].mxu0
      %v1014 = vpop.f32.mrb[0].mxu0
      %v1015 = vadd.f32 %v371, %v1014
      %v1016 = vpop.f32.mrb[0].mxu0
      %1017 = vmatprep.mubr.bf16.mxu0 0
      %1018 = vmatmul.mubr.bf16.gmra.mrb[0].mxu0 %v888
      %v1019 = vpop.f32.mrb[0].mxu0
      %v1020 = vadd.f32 %v371, %v1019
      %v1021 = vpop.f32.mrb[0].mxu0
      %v1022 = vpop.f32.mrb[0].mxu0
      %v1023 = vadd.f32 %v371, %v1022
      %v1024 = vpop.f32.mrb[0].mxu0
      %1025 = vmatprep.mubr.bf16.mxu0 0
      %1026 = vmatmul.mubr.bf16.gmra.mrb[0].mxu0 %v891
      %v1027 = vpop.f32.mrb[0].mxu0
      %v1028 = vadd.f32 %v371, %v1027
      %v1029 = vpop.f32.mrb[0].mxu0
      %v1030 = vpop.f32.mrb[0].mxu0
      %v1031 = vadd.f32 %v371, %v1030
      %v1032 = vpop.f32.mrb[0].mxu0
      %1033 = vmatprep.mubr.bf16.mxu0 0
      %1034 = vmatmul.mubr.bf16.gmra.mrb[0].mxu0 %v894
      %v1035 = vpop.f32.mrb[0].mxu0
      %v1036 = vadd.f32 %v371, %v1035
      %v1037 = vpop.f32.mrb[0].mxu0
      %v1038 = vpop.f32.mrb[0].mxu0
      %v1039 = vadd.f32 %v371, %v1038
      %v1040 = vpop.f32.mrb[0].mxu0
      %1041 = vmatprep.mubr.bf16.mxu0 0
      %1042 = vmatmul.mubr.bf16.gmra.mrb[0].mxu0 %v897
      %v1043 = vpop.f32.mrb[0].mxu0
      %v1044 = vadd.f32 %v371, %v1043
      %v1045 = vpop.f32.mrb[0].mxu0
      %v1046 = vpop.f32.mrb[0].mxu0
      %v1047 = vadd.f32 %v371, %v1046
      %v1048 = vpop.f32.mrb[0].mxu0
      %1049 = vmatprep.mubr.bf16.mxu0 0
      %1050 = vmatmul.mubr.bf16.gmra.mrb[0].mxu0 %v900
      %v1051 = vpop.f32.mrb[0].mxu0
      %v1052 = vadd.f32 %v371, %v1051
      %v1053 = vpop.f32.mrb[0].mxu0
      %v1054 = vpop.f32.mrb[0].mxu0
      %v1055 = vadd.f32 %v371, %v1054
      %v1056 = vpop.f32.mrb[0].mxu0
      %1057 = vmatprep.mubr.bf16.mxu0 0
      %1058 = vmatmul.mubr.bf16.gmra.mrb[0].mxu0 %v903
      %v1059 = vpop.f32.mrb[0].mxu0
      %v1060 = vadd.f32 %v371, %v1059
      %v1061 = vpop.f32.mrb[0].mxu0
      %v1062 = vpop.f32.mrb[0].mxu0
      %v1063 = vadd.f32 %v371, %v1062
      %v1064 = vpop.f32.mrb[0].mxu0
      %1065 = vdwg.mxu0
      %v1066 = vmax.f32 %v940, 0.0
      %v1067 = vmax.f32 %v943, 0.0
      %v1068 = vmax.f32 %v948, 0.0
      %v1069 = vmax.f32 %v951, 0.0
      %v1070 = vmax.f32 %v956, 0.0
      %v1071 = vmax.f32 %v959, 0.0
      %v1072 = vmax.f32 %v964, 0.0
      %v1073 = vmax.f32 %v967, 0.0
      %v1074 = vmax.f32 %v972, 0.0
      %v1075 = vmax.f32 %v975, 0.0
      %v1076 = vmax.f32 %v980, 0.0
      %v1077 = vmax.f32 %v983, 0.0
      %v1078 = vmax.f32 %v988, 0.0
      %v1079 = vmax.f32 %v991, 0.0
      %v1080 = vmax.f32 %v996, 0.0
      %v1081 = vmax.f32 %v999, 0.0
      %v1082 = vmax.f32 %v1004, 0.0
      %v1083 = vmax.f32 %v1007, 0.0
      %v1084 = vmax.f32 %v1012, 0.0
      %v1085 = vmax.f32 %v1015, 0.0
      %v1086 = vmax.f32 %v1020, 0.0
      %v1087 = vmax.f32 %v1023, 0.0
      %v1088 = vmax.f32 %v1028, 0.0
      %v1089 = vmax.f32 %v1031, 0.0
      %v1090 = vmax.f32 %v1036, 0.0
      %v1091 = vmax.f32 %v1039, 0.0
      %v1092 = vmax.f32 %v1044, 0.0
      %v1093 = vmax.f32 %v1047, 0.0
      %v1094 = vmax.f32 %v1052, 0.0
      %v1095 = vmax.f32 %v1055, 0.0
      %v1096 = vmax.f32 %v1060, 0.0
      %v1097 = vmax.f32 %v1063, 0.0
      %v1098 = vadd.f32 %v1066, %v1067
      %v1099 = vadd.f32 %v1098, %v1068
      %v1100 = vadd.f32 %v1099, %v1069
      %v1101 = vadd.f32 %v1100, %v1070
      %v1102 = vadd.f32 %v1101, %v1071
      %v1103 = vadd.f32 %v1102, %v1072
      %v1104 = vadd.f32 %v1103, %v1073
      %v1105 = vadd.f32 %v1104, %v1074
      %v1106 = vadd.f32 %v1105, %v1075
      %v1107 = vadd.f32 %v1106, %v1076
      %v1108 = vadd.f32 %v1107, %v1077
      %v1109 = vadd.f32 %v1108, %v1078
      %v1110 = vadd.f32 %v1109, %v1079
      %v1111 = vadd.f32 %v1110, %v1080
      %v1112 = vadd.f32 %v1111, %v1081
      %v1113 = vadd.f32 %v1112, %v1082
      %v1114 = vadd.f32 %v1113, %v1083
      %v1115 = vadd.f32 %v1114, %v1084
      %v1116 = vadd.f32 %v1115, %v1085
      %v1117 = vadd.f32 %v1116, %v1086
      %v1118 = vadd.f32 %v1117, %v1087
      %v1119 = vadd.f32 %v1118, %v1088
      %v1120 = vadd.f32 %v1119, %v1089
      %v1121 = vadd.f32 %v1120, %v1090
      %v1122 = vadd.f32 %v1121, %v1091
      %v1123 = vadd.f32 %v1122, %v1092
      %v1124 = vadd.f32 %v1123, %v1093
      %v1125 = vadd.f32 %v1124, %v1094
      %v1126 = vadd.f32 %v1125, %v1095
      %v1127 = vadd.f32 %v1126, %v1096
      %v1128 = vadd.f32 %v1127, %v1097
      %v1129 = vrot.slane %v1128, 4
      %v1130 = vadd.f32 %v1128, %v1129
      %v1131 = vrot.slane %v1130, 2
      %v1132 = vadd.f32 %v1130, %v1131
      %v1133 = vrot.slane %v1132, 1
      %v1134 = vadd.f32 %v1132, %v1133
      %v1135 = vld [vmem:[#allocation2] sm:$0x3]
      %vm1136 = vcmask 1040384
      %v1137 = vsel %vm1136, %v743, %v1134
      %v1138 = vadd.f32 %v1135, %v1137
      %1139 = vst [vmem:[#allocation2] sm:$0x3] %v1138
      // Predicated region
      $region45: #{feature_extractor_flame.1} parent=39 // pred_check
        %p1140 = pneg %p325
      $region46: #{feature_extractor_flame.1} parent=39 // pred_check_branch
        %1142 = sbr.rel (%p1140) target = $region48
      $region47: #{feature_extractor_flame.1} parent=39 // pred_region
        %v1143 = vld [vmem:[#allocation2] sm:$0x3]
        %v1144 = vmul.f32 %v1143, 0.00390625
        %v1145 = vld [vmem:[%s314] sm:$0xff]
        %v1146 = vld [vmem:[%s314 + $0x8] sm:$0xff]
        %v1147 = vld [vmem:[%s314 + $0x10] sm:$0xff]
        %v1148 = vld [vmem:[%s314 + $0x18] sm:$0xff]
        %v1149 = vld [vmem:[%s314 + $0x20] sm:$0xff]
        %v1150 = vld [vmem:[%s314 + $0x28] sm:$0xff]
        %v1151 = vld [vmem:[%s314 + $0x30] sm:$0xff]
        %v1152 = vld [vmem:[%s314 + $0x38] sm:$0xff]
        %v1153 = vld [vmem:[%s314 + $0x40] sm:$0xff]
        %v1154 = vld [vmem:[%s314 + $0x48] sm:$0xff]
        %v1155 = vld [vmem:[%s314 + $0x50] sm:$0xff]
        %v1156 = vld [vmem:[%s314 + $0x58] sm:$0xff]
        %v1157 = vld [vmem:[%s314 + $0x60] sm:$0xff]
        %v1158 = vld [vmem:[%s314 + $0x68] sm:$0xff]
        %v1159 = vld [vmem:[%s314 + $0x70] sm:$0xff]
        %v1160 = vld [vmem:[%s314 + $0x78] sm:$0xff]
        %v1161 = vld [vmem:[%s314 + $0x80] sm:$0xff]
        %v1162 = vld [vmem:[%s314 + $0x88] sm:$0xff]
        %v1163 = vld [vmem:[%s314 + $0x90] sm:$0xff]
        %v1164 = vld [vmem:[%s314 + $0x98] sm:$0xff]
        %v1165 = vld [vmem:[%s314 + $0xa0] sm:$0xff]
        %v1166 = vld [vmem:[%s314 + $0xa8] sm:$0xff]
        %v1167 = vld [vmem:[%s314 + $0xb0] sm:$0xff]
        %v1168 = vld [vmem:[%s314 + $0xb8] sm:$0xff]
        %v1169 = vld [vmem:[%s314 + $0xc0] sm:$0xff]
        %v1170 = vld [vmem:[%s314 + $0xc8] sm:$0xff]
        %v1171 = vld [vmem:[%s314 + $0xd0] sm:$0xff]
        %v1172 = vld [vmem:[%s314 + $0xd8] sm:$0xff]
        %v1173 = vld [vmem:[%s314 + $0xe0] sm:$0xff]
        %v1174 = vld [vmem:[%s314 + $0xe8] sm:$0xff]
        %v1175 = vld [vmem:[%s314 + $0xf0] sm:$0xff]
        %v1176 = vld [vmem:[%s314 + $0xf8] sm:$0xff]
        %v1177 = vld [vmem:[%s314 + $0x100] sm:$0xff]
        %v1178 = vld [vmem:[%s314 + $0x108] sm:$0xff]
        %v1179 = vld [vmem:[%s314 + $0x110] sm:$0xff]
        %v1180 = vld [vmem:[%s314 + $0x118] sm:$0xff]
        %v1181 = vld [vmem:[%s314 + $0x120] sm:$0xff]
        %v1182 = vld [vmem:[%s314 + $0x128] sm:$0xff]
        %v1183 = vld [vmem:[%s314 + $0x130] sm:$0xff]
        %v1184 = vld [vmem:[%s314 + $0x138] sm:$0xff]
        %v1185 = vld [vmem:[%s314 + $0x140] sm:$0xff]
        %v1186 = vld [vmem:[%s314 + $0x148] sm:$0xff]
        %v1187 = vld [vmem:[%s314 + $0x150] sm:$0xff]
        %v1188 = vld [vmem:[%s314 + $0x158] sm:$0xff]
        %v1189 = vld [vmem:[%s314 + $0x160] sm:$0xff]
        %v1190 = vld [vmem:[%s314 + $0x168] sm:$0xff]
        %v1191 = vld [vmem:[%s314 + $0x170] sm:$0xff]
        %v1192 = vld [vmem:[%s314 + $0x178] sm:$0xff]
        %v1193 = vld [vmem:[%s318] sm:$0x7]
        %v1195 = vlaneseq
        %v1196 = vshrl.u32 %v1195, 7
        %v1197 = vsub.s32 0, %v1196
        %v1198 = vrot.slane %v1193, %v1197
        %v1199 = vlaneseq
        %v1200 = vshrl.u32 %v1199, 7
        %v1201 = vsub.s32 1, %v1200
        %v1202 = vrot.slane %v1193, %v1201
        %v1203 = vlaneseq
        %v1204 = vshrl.u32 %v1203, 7
        %v1205 = vsub.s32 2, %v1204
        %v1206 = vrot.slane %v1193, %v1205
        %1210 = vmatprep.subr.mxu0 %v1146
        %1211 = vmatpush1.msra.mxu0 %v1145
        %1212 = vmatprep.subr.mxu0 %v1149
        %1213 = vmatpush1.msra.mxu0 %v1148
        %1214 = vmatprep.subr.mxu0 %v1152
        %1215 = vmatpush1.msra.mxu0 %v1151
        %1216 = vmatprep.subr.mxu0 %v1155
        %1217 = vmatpush1.msra.mxu0 %v1154
        %1218 = vmatprep.subr.mxu0 %v1158
        %1219 = vmatpush1.msra.mxu0 %v1157
        %1220 = vmatprep.subr.mxu0 %v1161
        %1221 = vmatpush1.msra.mxu0 %v1160
        %1222 = vmatprep.subr.mxu0 %v1164
        %1223 = vmatpush1.msra.mxu0 %v1163
        %1224 = vmatprep.subr.mxu0 %v1167
        %1225 = vmatpush1.msra.mxu0 %v1166
        %1226 = vmatprep.subr.mxu0 %v1170
        %1227 = vmatpush1.msra.mxu0 %v1169
        %1228 = vmatprep.subr.mxu0 %v1173
        %1229 = vmatpush1.msra.mxu0 %v1172
        %1230 = vmatprep.subr.mxu0 %v1176
        %1231 = vmatpush1.msra.mxu0 %v1175
        %1232 = vmatprep.subr.mxu0 %v1179
        %1233 = vmatpush1.msra.mxu0 %v1178
        %1234 = vmatprep.subr.mxu0 %v1182
        %1235 = vmatpush1.msra.mxu0 %v1181
        %1236 = vmatprep.subr.mxu0 %v1185
        %1237 = vmatpush1.msra.mxu0 %v1184
        %1238 = vmatprep.subr.mxu0 %v1188
        %1239 = vmatpush1.msra.mxu0 %v1187
        %1240 = vmatprep.subr.mxu0 %v1191
        %1241 = vmatpush1.msra.mxu0 %v1190
        %1242 = vmatprep.subr.mxu0 0.0
        %1243 = vmatpush1.msra.mxu0 0.0
        %1244 = vmatprep.subr.mxu0 0.0
        %1245 = vmatpush1.msra.mxu0 0.0
        %1246 = vmatprep.subr.mxu0 0.0
        %1247 = vmatpush1.msra.mxu0 0.0
        %1248 = vmatprep.subr.mxu0 0.0
        %1249 = vmatpush1.msra.mxu0 0.0
        %1250 = vmatprep.subr.mxu0 0.0
        %1251 = vmatpush1.msra.mxu0 0.0
        %1252 = vmatprep.subr.mxu0 0.0
        %1253 = vmatpush1.msra.mxu0 0.0
        %1254 = vmatprep.subr.mxu0 0.0
        %1255 = vmatpush1.msra.mxu0 0.0
        %1256 = vmatprep.subr.mxu0 0.0
        %1257 = vmatpush1.msra.mxu0 0.0
        %1258 = vmatprep.subr.mxu0 0.0
        %1259 = vmatpush1.msra.mxu0 0.0
        %1260 = vmatprep.subr.mxu0 0.0
        %1261 = vmatpush1.msra.mxu0 0.0
        %1262 = vmatprep.subr.mxu0 0.0
        %1263 = vmatpush1.msra.mxu0 0.0
        %1264 = vmatprep.subr.mxu0 0.0
        %1265 = vmatpush1.msra.mxu0 0.0
        %1266 = vmatprep.subr.mxu0 0.0
        %1267 = vmatpush1.msra.mxu0 0.0
        %1268 = vmatprep.subr.mxu0 0.0
        %1269 = vmatpush1.msra.mxu0 0.0
        %1270 = vmatprep.subr.mxu0 0.0
        %1271 = vmatpush1.msra.mxu0 0.0
        %1272 = vmatprep.subr.mxu0 0.0
        %1273 = vmatpush1.msra.mxu0 0.0
        %1274 = vmatprep.mubr.f32.mxu0 0.0
        %1275 = vmatmul.mubr.f32.gmra.mrb[0].mxu0 %v1144
        %v1276 = vpop.f32.mrb[0].mxu0
        %v1277 = vadd.f32 %v1198, %v1276
        %v1278 = vpop.f32.mrb[0].mxu0
        %v1279 = vadd.f32 %v1202, %v1278
        %1280 = vdwg.mxu0
        %1281 = vmatprep.subr.mxu0 0.0
        %1282 = vmatpush1.msra.mxu0 %v1147
        %1283 = vmatprep.subr.mxu0 0.0
        %1284 = vmatpush1.msra.mxu0 %v1150
        %1285 = vmatprep.subr.mxu0 0.0
        %1286 = vmatpush1.msra.mxu0 %v1153
        %1287 = vmatprep.subr.mxu0 0.0
        %1288 = vmatpush1.msra.mxu0 %v1156
        %1289 = vmatprep.subr.mxu0 0.0
        %1290 = vmatpush1.msra.mxu0 %v1159
        %1291 = vmatprep.subr.mxu0 0.0
        %1292 = vmatpush1.msra.mxu0 %v1162
        %1293 = vmatprep.subr.mxu0 0.0
        %1294 = vmatpush1.msra.mxu0 %v1165
        %1295 = vmatprep.subr.mxu0 0.0
        %1296 = vmatpush1.msra.mxu0 %v1168
        %1297 = vmatprep.subr.mxu0 0.0
        %1298 = vmatpush1.msra.mxu0 %v1171
        %1299 = vmatprep.subr.mxu0 0.0
        %1300 = vmatpush1.msra.mxu0 %v1174
        %1301 = vmatprep.subr.mxu0 0.0
        %1302 = vmatpush1.msra.mxu0 %v1177
        %1303 = vmatprep.subr.mxu0 0.0
        %1304 = vmatpush1.msra.mxu0 %v1180
        %1305 = vmatprep.subr.mxu0 0.0
        %1306 = vmatpush1.msra.mxu0 %v1183
        %1307 = vmatprep.subr.mxu0 0.0
        %1308 = vmatpush1.msra.mxu0 %v1186
        %1309 = vmatprep.subr.mxu0 0.0
        %1310 = vmatpush1.msra.mxu0 %v1189
        %1311 = vmatprep.subr.mxu0 0.0
        %1312 = vmatpush1.msra.mxu0 %v1192
        %1313 = vmatprep.subr.mxu0 0.0
        %1314 = vmatpush1.msra.mxu0 0.0
        %1315 = vmatprep.subr.mxu0 0.0
        %1316 = vmatpush1.msra.mxu0 0.0
        %1317 = vmatprep.subr.mxu0 0.0
        %1318 = vmatpush1.msra.mxu0 0.0
        %1319 = vmatprep.subr.mxu0 0.0
        %1320 = vmatpush1.msra.mxu0 0.0
        %1321 = vmatprep.subr.mxu0 0.0
        %1322 = vmatpush1.msra.mxu0 0.0
        %1323 = vmatprep.subr.mxu0 0.0
        %1324 = vmatpush1.msra.mxu0 0.0
        %1325 = vmatprep.subr.mxu0 0.0
        %1326 = vmatpush1.msra.mxu0 0.0
        %1327 = vmatprep.subr.mxu0 0.0
        %1328 = vmatpush1.msra.mxu0 0.0
        %1329 = vmatprep.subr.mxu0 0.0
        %1330 = vmatpush1.msra.mxu0 0.0
        %1331 = vmatprep.subr.mxu0 0.0
        %1332 = vmatpush1.msra.mxu0 0.0
        %1333 = vmatprep.subr.mxu0 0.0
        %1334 = vmatpush1.msra.mxu0 0.0
        %1335 = vmatprep.subr.mxu0 0.0
        %1336 = vmatpush1.msra.mxu0 0.0
        %1337 = vmatprep.subr.mxu0 0.0
        %1338 = vmatpush1.msra.mxu0 0.0
        %1339 = vmatprep.subr.mxu0 0.0
        %1340 = vmatpush1.msra.mxu0 0.0
        %1341 = vmatprep.subr.mxu0 0.0
        %1342 = vmatpush1.msra.mxu0 0.0
        %1343 = vmatprep.subr.mxu0 0.0
        %1344 = vmatpush1.msra.mxu0 0.0
        %1345 = vmatprep.mubr.f32.mxu0 0.0
        %1346 = vmatmul.mubr.f32.gmra.mrb[0].mxu0 %v1144
        %v1347 = vpop.f32.mrb[0].mxu0
        %v1348 = vadd.f32 %v1206, %v1347
        %v1349 = vpop.f32.mrb[0].mxu0
        %1350 = vdwg.mxu0
        %v1354 = vcombine.low %v1277, %v1279
        %v1356 = vunpack.c.l.s4 1983009808
        %v1357 = vunpack.c.0.s8 %v1356
        %v1358 = vlaneseq
        %v1359 = vshrl.u32 %v1358, 7
        %v1360 = vsub.s32 %v1357, %v1359
        %v1361 = vrot.slane %v1354, %v1360
        %v1363 = vunpack.c.l.s4 1983009808
        %v1364 = vunpack.c.0.s8 %v1363
        %v1365 = vlaneseq
        %v1366 = vshrl.u32 %v1365, 7
        %v1367 = vsub.s32 %v1364, %v1366
        %v1368 = vrot.slane %v1348, %v1367
        %v1369 = vcombine.low %v1361, %v1368
        %1371 = vst [vmem:[%s323] sm:$0x3f] %v1369
      $region48: #{feature_extractor_flame.1} parent=39 // pred_fallthru
        _
      %p1372 = scmp.lt.s32.totalorder %s20, 1
      %s1373 = scalar_select %p1372, %s20, 1
      %s1374 = smul.addr %s1373, 3
      %s1375 = smul.addr %s1374, 2
      %s1376 = scalar_lea.vmem %s5, %s1375
      // Predicated region
      $region49: #{feature_extractor_flame.1} parent=39 // pred_check
        %p1377 = pneg %p178
      $region50: #{feature_extractor_flame.1} parent=39 // pred_check_branch
        %1379 = sbr.rel (%p1377) target = $region52
      $region51: #{feature_extractor_flame.1} parent=39 // pred_region
        _
      $region52: #{feature_extractor_flame.1} parent=39 // pred_fallthru
        _
    $region40: #{feature_extractor_flame.1} parent=5 // pred_fallthru
      _
    %p1380 = scmp.le.s32.totalorder 2, %s11
    // Predicated region
    $region53: #{feature_extractor_flame.1} parent=5 // pred_check
      %p1381 = pneg %p1380
    $region54: #{feature_extractor_flame.1} parent=5 // pred_check_branch
      %1383 = sbr.rel (%p1381) target = $region56
    $region55: #{feature_extractor_flame.1} parent=5 // pred_region
      %s1384 = ssub.s32 %s11, 2
      // Predicated region
      $region57: #{feature_extractor_flame.1} parent=55 // pred_check
        %p1385 = pneg %p184
      $region58: #{feature_extractor_flame.1} parent=55 // pred_check_branch
        %1387 = sbr.rel (%p1385) target = $region60
      $region59: #{feature_extractor_flame.1} parent=55 // pred_region
        %p1388 = scmp.lt.s32.totalorder %s22, 1
        %s1389 = scalar_select %p1388, %s22, 1
        %s1390 = smul.addr %s1389, 3
        %s1391 = smul.addr %s1390, 2
        %s1392 = scalar_lea.vmem %s5, %s1391
      $region60: #{feature_extractor_flame.1} parent=55 // pred_fallthru
        _
    $region56: #{feature_extractor_flame.1} parent=5 // pred_fallthru
      _
  $region6: #{feature_extractor_flame.1} parent=0 // loop_footer
    %s15 = sadd.s32 1, %s11
  $region7: #{feature_extractor_flame.1} parent=0 // loop_footer_branch
    %10 = sbr.rel target = $region3
  $region8: #{feature_extractor_flame.1} parent=0 // loop_exit
    _

</llo_original>
